<compile_context>
chip_gen: v6e
topology: v6e:2x2x1
jax: 0.10.0
libtpu: 0.0.40
codegen_flags: <defaults>
</compile_context>

<pallas_src>
import jax
import jax.numpy as jnp
from jax.experimental import pallas as pl
from jax.experimental.pallas import tpu as pltpu


# ----------------------------------------------------------------------------
# Kernel
# ----------------------------------------------------------------------------
def policy_kernel(x_ref, yf_ref,
                  wih_ref, whh_ref, blstm_ref,
                  w1x_ref, whz_ref, b1_ref,
                  w2_ref, b2_ref,
                  whead_ref, bhead_ref,
                  out_ref):
    B = x_ref.shape[0]
    H = whh_ref.shape[0]            # hidden_size
    TB = yf_ref.shape[0]
    T = TB // B                      # static sequence length

    # (A) Independent of the recurrence: issue first so the MXU/VPU work
    #     overlaps the latency-bound LSTM chain.
    pre_x = (jnp.dot(x_ref[...], w1x_ref[...],
                     preferred_element_type=jnp.float32)
             + b1_ref[...])                                   # (B, H)

    # (B) All T timesteps' input projection in a single MXU pass.
    #     Rows of gin: row t*B + b corresponds to y[b, t, :].
    gin = (jnp.dot(yf_ref[...], wih_ref[...],
                   preferred_element_type=jnp.float32)
           + blstm_ref[...])                                  # (T*B, 4H)

    # (C) Recurrence, fully unrolled (T is small & static) so slices of `gin`
    #     are static and the scheduler sees across "iterations".
    h = jnp.zeros((B, H), jnp.float32)
    c = jnp.zeros((B, H), jnp.float32)
    for t in range(T):
        gates = (gin[t * B:(t + 1) * B, :]
                 + jnp.dot(h, whh_ref[...],
                           preferred_element_type=jnp.float32))   # (B, 4H)
        # Gates were reordered on the host to [i, f, o, g]:
        sig = jax.nn.sigmoid(gates[:, :3 * H])                    # one EUP pass
        i = sig[:, 0 * H:1 * H]
        f = sig[:, 1 * H:2 * H]
        o = sig[:, 2 * H:3 * H]
        g = jnp.tanh(gates[:, 3 * H:4 * H])
        c = f * c + i * g
        h = o * jnp.tanh(c)

    # (D) concat([x, z]) @ W1  with the post-LSTM linear folded in on host:
    #     pre1 = x@W1x + h@(Wlin^T @ W1z) + b1'
    pre1 = pre_x + jnp.dot(h, whz_ref[...],
                           preferred_element_type=jnp.float32)
    t1 = jnp.maximum(pre1, 0.0)                                   # ReLU

    pre2 = (jnp.dot(t1, w2_ref[...], preferred_element_type=jnp.float32)
            + b2_ref[...])
    tau = pre2 * jnp.clip(pre2 + 3.0, 0.0, 6.0) * (1.0 / 6.0)     # Hardswish

    # (E) Fused output heads: one (H, 2O) matmul, lane-select tanh vs exp.
    head = (jnp.dot(tau, whead_ref[...], preferred_element_type=jnp.float32)
            + bhead_ref[...])                                     # (B, 2O)
    O = head.shape[1] // 2
    lane = jax.lax.broadcasted_iota(jnp.int32, head.shape, 1)
    out_ref[...] = jnp.where(lane < O, jnp.tanh(head), jnp.exp(head))


# ----------------------------------------------------------------------------
# Host-side wrapper
# ----------------------------------------------------------------------------
def policy_net_forward(x, y, params):
    """x: (B, I) f32, y: (B, T, R) f32 (batch_first, like PyTorch)."""
    B, I = x.shape
    _, T, R = y.shape
    H = params["w_hh"].shape[1]          # w_hh: (4H, H)
    E = params["w_lin"].shape[0]         # embedded_length (64)
    O = params["w_mu"].shape[0]

    # time-major then flatten: row t*B + b == y[b, t, :]
    y_flat = jnp.transpose(y, (1, 0, 2)).reshape(T * B, R)

    # Reorder LSTM gate rows from PyTorch's [i, f, g, o] to [i, f, o, g] so
    # the kernel applies one sigmoid to a contiguous 3H block.
    perm = jnp.concatenate([jnp.arange(0, 2 * H),
                            jnp.arange(3 * H, 4 * H),
                            jnp.arange(2 * H, 3 * H)])
    wih_t = params["w_ih"][perm].T                       # (R, 4H)
    whh_t = params["w_hh"][perm].T                       # (H, 4H)
    blstm = (params["b_ih"] + params["b_hh"])[perm].reshape(1, 4 * H)

    # Fold the post-LSTM Linear into W1's z-half.
    w1_t = params["w1"].T                                # (I+E, H)
    w1x_t = w1_t[:I]                                     # (I, H)
    w1z_t = w1_t[I:]                                     # (E, H)
    wlin_t = params["w_lin"].T                           # (H, E)
    whz = wlin_t @ w1z_t                                 # (H, H)
    b1f = (params["b1"] + params["b_lin"] @ w1z_t).reshape(1, H)

    w2_t = params["w2"].T                                # (H, H)
    b2 = params["b2"].reshape(1, H)

    # Fused heads.
    whead = jnp.concatenate([params["w_mu"].T, params["w_ls"].T], axis=1)  # (H, 2O)
    bhead = jnp.concatenate([params["b_mu"], params["b_ls"]]).reshape(1, 2 * O)

    vmem = pl.BlockSpec(memory_space=pltpu.MemorySpace.VMEM)
    n_inputs = 12

    # Advisory cost estimate (flops / transcendentals / bytes).
    flops = (2 * T * B * R * 4 * H          # y @ W_ih (single pass)
             + 2 * T * B * H * 4 * H        # recurrent h @ W_hh
             + 2 * B * I * H                # x @ W1x
             + 2 * B * H * H                # h @ Whz
             + 2 * B * H * H                # t1 @ W2
             + 2 * B * H * 2 * O)           # fused heads
    transcendentals = T * B * 5 * H + 2 * B * 2 * O
    bytes_accessed = 4 * (x.size + y_flat.size + wih_t.size + whh_t.size
                          + blstm.size + w1x_t.size + whz.size + b1f.size
                          + w2_t.size + b2.size + whead.size + bhead.size
                          + B * 2 * O)

    out = pl.pallas_call(
        policy_kernel,
        out_shape=jax.ShapeDtypeStruct((B, 2 * O), jnp.float32),
        in_specs=[vmem] * n_inputs,
        out_specs=vmem,
        cost_estimate=pl.CostEstimate(flops=int(flops),
                                      transcendentals=int(transcendentals),
                                      bytes_accessed=int(bytes_accessed)),
    )(x, y_flat,
      wih_t, whh_t, blstm,
      w1x_t, whz, b1f,
      w2_t, b2,
      whead, bhead)

    return out[:, :O], out[:, O:]


# ----------------------------------------------------------------------------
# Pure-JAX reference (PyTorch semantics, original gate order) for sanity check
# ----------------------------------------------------------------------------
def policy_net_ref(x, y, params):
    H = params["w_hh"].shape[1]
    B, T, _ = y.shape
    h = jnp.zeros((B, H), jnp.float32)
    c = jnp.zeros((B, H), jnp.float32)
    b = params["b_ih"] + params["b_hh"]
    for t in range(T):
        gates = y[:, t, :] @ params["w_ih"].T + h @ params["w_hh"].T + b
        i = jax.nn.sigmoid(gates[:, :H])
        f = jax.nn.sigmoid(gates[:, H:2 * H])
        g = jnp.tanh(gates[:, 2 * H:3 * H])
        o = jax.nn.sigmoid(gates[:, 3 * H:])
        c = f * c + i * g
        h = o * jnp.tanh(c)
    z = h @ params["w_lin"].T + params["b_lin"]
    iv = jnp.concatenate([x, z], axis=1)
    t1 = jax.nn.relu(iv @ params["w1"].T + params["b1"])
    p2 = t1 @ params["w2"].T + params["b2"]
    tau = p2 * jnp.clip(p2 + 3.0, 0.0, 6.0) / 6.0
    mu = jnp.tanh(tau @ params["w_mu"].T + params["b_mu"])
    sigma = jnp.exp(tau @ params["w_ls"].T + params["b_ls"])
    return mu, sigma


# ----------------------------------------------------------------------------
# Deterministic parameter init (same shapes as the PyTorch module; synthetic
# values — scaled normal stands in for orthogonal/xavier init).
# ----------------------------------------------------------------------------
def init_params(key, interior, relative, hidden, output, embedded=64):
    ks = jax.random.split(key, 8)

    def w(k, shape):
        fan_in = shape[-1]
        return jax.random.normal(k, shape, jnp.float32) / jnp.sqrt(fan_in)

    return {
        "w_ih": w(ks[0], (4 * hidden, relative)),
        "w_hh": w(ks[1], (4 * hidden, hidden)),
        "b_ih": jnp.zeros((4 * hidden,), jnp.float32),
        "b_hh": jnp.zeros((4 * hidden,), jnp.float32),
        "w_lin": w(ks[2], (embedded, hidden)),
        "b_lin": jnp.zeros((embedded,), jnp.float32),
        "w1": w(ks[3], (hidden, interior + embedded)),
        "b1": jnp.zeros((hidden,), jnp.float32),
        "w2": w(ks[4], (hidden, hidden)),
        "b2": jnp.zeros((hidden,), jnp.float32),
        "w_mu": w(ks[5], (output, hidden)),
        "b_mu": jnp.zeros((output,), jnp.float32),
        "w_ls": w(ks[6], (output, hidden)),
        "b_ls": jnp.zeros((output,), jnp.float32),
    }


if __name__ == "__main__":
    # TODO(synk): at B=2 only 2/8 f32 sublanes carry data; batch multiple
    # rollouts per call (B multiple of 8, ideally 128+) for real throughput.
    B, T = 2, 8
    interior_obs_size, relative_obs_size = 16, 8
    hidden_size, output_size = 32, 4

    key = jax.random.PRNGKey(0)
    kx, ky, kp = jax.random.split(key, 3)
    x = jax.random.normal(kx, (B, interior_obs_size), jnp.float32)
    y = jax.random.normal(ky, (B, T, relative_obs_size), jnp.float32)
    params = init_params(kp, interior_obs_size, relative_obs_size,
                         hidden_size, output_size)

    mu, sigma = policy_net_forward(x, y, params)
    jax.block_until_ready((mu, sigma))

    mu_ref, sigma_ref = policy_net_ref(x, y, params)
    assert mu.shape == (B, output_size) and sigma.shape == (B, output_size)
    # Host-side algebraic fold (Wlin into W1z) reassociates f32 sums; allow a
    # slightly looser tolerance than exact bit-match.
    assert jnp.allclose(mu, mu_ref, atol=2e-5, rtol=1e-4)
    assert jnp.allclose(sigma, sigma_ref, atol=2e-5, rtol=1e-4)

    print("KERNEL_OK")
</pallas_src>

<mosaic_0001>
module attributes {stable_mosaic.version = 11 : i64} {
  func.func @policy_kernel(%arg0: memref<2x16xf32, #tpu.memory_space<vmem>>, %arg1: memref<16x8xf32, #tpu.memory_space<vmem>>, %arg2: memref<8x128xf32, #tpu.memory_space<vmem>>, %arg3: memref<32x128xf32, #tpu.memory_space<vmem>>, %arg4: memref<1x128xf32, #tpu.memory_space<vmem>>, %arg5: memref<16x32xf32, #tpu.memory_space<vmem>>, %arg6: memref<32x32xf32, #tpu.memory_space<vmem>>, %arg7: memref<1x32xf32, #tpu.memory_space<vmem>>, %arg8: memref<32x32xf32, #tpu.memory_space<vmem>>, %arg9: memref<1x32xf32, #tpu.memory_space<vmem>>, %arg10: memref<32x8xf32, #tpu.memory_space<vmem>>, %arg11: memref<1x8xf32, #tpu.memory_space<vmem>>, %arg12: memref<2x8xf32, #tpu.memory_space<vmem>>) attributes {dimension_semantics = [], scalar_prefetch = 0 : i64, scratch_operands = 0 : i64, tpu.core_type = #tpu.core_type<tc>} {
    %c0 = arith.constant 0 : index
    %c0_0 = arith.constant 0 : index
    %0 = vector.load %arg0[%c0, %c0_0] : memref<2x16xf32, #tpu.memory_space<vmem>>, vector<2x16xf32>
    %c0_1 = arith.constant 0 : index
    %c0_2 = arith.constant 0 : index
    %1 = vector.load %arg5[%c0_1, %c0_2] : memref<16x32xf32, #tpu.memory_space<vmem>>, vector<16x32xf32>
    %cst = arith.constant dense<0.000000e+00> : vector<2x32xf32>
    %2 = tpu.matmul %0, %1, %cst {dimension_numbers = #tpu.dot_dimension_numbers<[1], [0], [0], [1], [0, 0, 1, 1], [], []>} : vector<2x16xf32>, vector<16x32xf32>, vector<2x32xf32> -> vector<2x32xf32>
    %c0_3 = arith.constant 0 : index
    %c0_4 = arith.constant 0 : index
    %3 = vector.load %arg7[%c0_3, %c0_4] : memref<1x32xf32, #tpu.memory_space<vmem>>, vector<1x32xf32>
    %4 = vector.broadcast %3 : vector<1x32xf32> to vector<2x32xf32>
    %5 = arith.addf %2, %4 : vector<2x32xf32>
    %c0_5 = arith.constant 0 : index
    %c0_6 = arith.constant 0 : index
    %6 = vector.load %arg1[%c0_5, %c0_6] : memref<16x8xf32, #tpu.memory_space<vmem>>, vector<16x8xf32>
    %c0_7 = arith.constant 0 : index
    %c0_8 = arith.constant 0 : index
    %7 = vector.load %arg2[%c0_7, %c0_8] : memref<8x128xf32, #tpu.memory_space<vmem>>, vector<8x128xf32>
    %cst_9 = arith.constant dense<0.000000e+00> : vector<16x128xf32>
    %8 = tpu.matmul %6, %7, %cst_9 {dimension_numbers = #tpu.dot_dimension_numbers<[1], [0], [0], [1], [0, 0, 1, 1], [], []>} : vector<16x8xf32>, vector<8x128xf32>, vector<16x128xf32> -> vector<16x128xf32>
    %c0_10 = arith.constant 0 : index
    %c0_11 = arith.constant 0 : index
    %9 = vector.load %arg4[%c0_10, %c0_11] : memref<1x128xf32, #tpu.memory_space<vmem>>, vector<1x128xf32>
    %10 = vector.broadcast %9 : vector<1x128xf32> to vector<16x128xf32>
    %11 = arith.addf %8, %10 : vector<16x128xf32>
    %cst_12 = arith.constant 0.000000e+00 : f32
    %12 = vector.broadcast %cst_12 : f32 to vector<2x32xf32>
    %cst_13 = arith.constant 0.000000e+00 : f32
    %13 = vector.broadcast %cst_13 : f32 to vector<2x32xf32>
    %14 = vector.extract_strided_slice %11 {offsets = [0, 0], sizes = [2, 128], strides = [1, 1]} : vector<16x128xf32> to vector<2x128xf32>
    %c0_14 = arith.constant 0 : index
    %c0_15 = arith.constant 0 : index
    %15 = vector.load %arg3[%c0_14, %c0_15] : memref<32x128xf32, #tpu.memory_space<vmem>>, vector<32x128xf32>
    %cst_16 = arith.constant dense<0.000000e+00> : vector<2x128xf32>
    %16 = tpu.matmul %12, %15, %cst_16 {dimension_numbers = #tpu.dot_dimension_numbers<[1], [0], [0], [1], [0, 0, 1, 1], [], []>} : vector<2x32xf32>, vector<32x128xf32>, vector<2x128xf32> -> vector<2x128xf32>
    %17 = arith.addf %14, %16 : vector<2x128xf32>
    %18 = vector.extract_strided_slice %17 {offsets = [0, 0], sizes = [2, 96], strides = [1, 1]} : vector<2x128xf32> to vector<2x96xf32>
    %19 = arith.negf %18 : vector<2x96xf32>
    %20 = math.exp %19 : vector<2x96xf32>
    %cst_17 = arith.constant 1.000000e+00 : f32
    %21 = vector.broadcast %cst_17 : f32 to vector<2x96xf32>
    %22 = arith.addf %21, %20 : vector<2x96xf32>
    %23 = arith.divf %21, %22 : vector<2x96xf32>
    %24 = vector.extract_strided_slice %23 {offsets = [0, 0], sizes = [2, 32], strides = [1, 1]} : vector<2x96xf32> to vector<2x32xf32>
    %25 = vector.extract_strided_slice %23 {offsets = [0, 32], sizes = [2, 32], strides = [1, 1]} : vector<2x96xf32> to vector<2x32xf32>
    %26 = vector.extract_strided_slice %23 {offsets = [0, 64], sizes = [2, 32], strides = [1, 1]} : vector<2x96xf32> to vector<2x32xf32>
    %27 = vector.extract_strided_slice %17 {offsets = [0, 96], sizes = [2, 32], strides = [1, 1]} : vector<2x128xf32> to vector<2x32xf32>
    %28 = math.tanh %27 : vector<2x32xf32>
    %29 = arith.mulf %25, %13 : vector<2x32xf32>
    %30 = arith.mulf %24, %28 : vector<2x32xf32>
    %31 = arith.addf %29, %30 : vector<2x32xf32>
    %32 = math.tanh %31 : vector<2x32xf32>
    %33 = arith.mulf %26, %32 : vector<2x32xf32>
    %34 = vector.extract_strided_slice %11 {offsets = [2, 0], sizes = [2, 128], strides = [1, 1]} : vector<16x128xf32> to vector<2x128xf32>
    %c0_18 = arith.constant 0 : index
    %c0_19 = arith.constant 0 : index
    %35 = vector.load %arg3[%c0_18, %c0_19] : memref<32x128xf32, #tpu.memory_space<vmem>>, vector<32x128xf32>
    %cst_20 = arith.constant dense<0.000000e+00> : vector<2x128xf32>
    %36 = tpu.matmul %33, %35, %cst_20 {dimension_numbers = #tpu.dot_dimension_numbers<[1], [0], [0], [1], [0, 0, 1, 1], [], []>} : vector<2x32xf32>, vector<32x128xf32>, vector<2x128xf32> -> vector<2x128xf32>
    %37 = arith.addf %34, %36 : vector<2x128xf32>
    %38 = vector.extract_strided_slice %37 {offsets = [0, 0], sizes = [2, 96], strides = [1, 1]} : vector<2x128xf32> to vector<2x96xf32>
    %39 = arith.negf %38 : vector<2x96xf32>
    %40 = math.exp %39 : vector<2x96xf32>
    %cst_21 = arith.constant 1.000000e+00 : f32
    %41 = vector.broadcast %cst_21 : f32 to vector<2x96xf32>
    %42 = arith.addf %41, %40 : vector<2x96xf32>
    %43 = arith.divf %41, %42 : vector<2x96xf32>
    %44 = vector.extract_strided_slice %43 {offsets = [0, 0], sizes = [2, 32], strides = [1, 1]} : vector<2x96xf32> to vector<2x32xf32>
    %45 = vector.extract_strided_slice %43 {offsets = [0, 32], sizes = [2, 32], strides = [1, 1]} : vector<2x96xf32> to vector<2x32xf32>
    %46 = vector.extract_strided_slice %43 {offsets = [0, 64], sizes = [2, 32], strides = [1, 1]} : vector<2x96xf32> to vector<2x32xf32>
    %47 = vector.extract_strided_slice %37 {offsets = [0, 96], sizes = [2, 32], strides = [1, 1]} : vector<2x128xf32> to vector<2x32xf32>
    %48 = math.tanh %47 : vector<2x32xf32>
    %49 = arith.mulf %45, %31 : vector<2x32xf32>
    %50 = arith.mulf %44, %48 : vector<2x32xf32>
    %51 = arith.addf %49, %50 : vector<2x32xf32>
    %52 = math.tanh %51 : vector<2x32xf32>
    %53 = arith.mulf %46, %52 : vector<2x32xf32>
    %54 = vector.extract_strided_slice %11 {offsets = [4, 0], sizes = [2, 128], strides = [1, 1]} : vector<16x128xf32> to vector<2x128xf32>
    %c0_22 = arith.constant 0 : index
    %c0_23 = arith.constant 0 : index
    %55 = vector.load %arg3[%c0_22, %c0_23] : memref<32x128xf32, #tpu.memory_space<vmem>>, vector<32x128xf32>
    %cst_24 = arith.constant dense<0.000000e+00> : vector<2x128xf32>
    %56 = tpu.matmul %53, %55, %cst_24 {dimension_numbers = #tpu.dot_dimension_numbers<[1], [0], [0], [1], [0, 0, 1, 1], [], []>} : vector<2x32xf32>, vector<32x128xf32>, vector<2x128xf32> -> vector<2x128xf32>
    %57 = arith.addf %54, %56 : vector<2x128xf32>
    %58 = vector.extract_strided_slice %57 {offsets = [0, 0], sizes = [2, 96], strides = [1, 1]} : vector<2x128xf32> to vector<2x96xf32>
    %59 = arith.negf %58 : vector<2x96xf32>
    %60 = math.exp %59 : vector<2x96xf32>
    %cst_25 = arith.constant 1.000000e+00 : f32
    %61 = vector.broadcast %cst_25 : f32 to vector<2x96xf32>
    %62 = arith.addf %61, %60 : vector<2x96xf32>
    %63 = arith.divf %61, %62 : vector<2x96xf32>
    %64 = vector.extract_strided_slice %63 {offsets = [0, 0], sizes = [2, 32], strides = [1, 1]} : vector<2x96xf32> to vector<2x32xf32>
    %65 = vector.extract_strided_slice %63 {offsets = [0, 32], sizes = [2, 32], strides = [1, 1]} : vector<2x96xf32> to vector<2x32xf32>
    %66 = vector.extract_strided_slice %63 {offsets = [0, 64], sizes = [2, 32], strides = [1, 1]} : vector<2x96xf32> to vector<2x32xf32>
    %67 = vector.extract_strided_slice %57 {offsets = [0, 96], sizes = [2, 32], strides = [1, 1]} : vector<2x128xf32> to vector<2x32xf32>
    %68 = math.tanh %67 : vector<2x32xf32>
    %69 = arith.mulf %65, %51 : vector<2x32xf32>
    %70 = arith.mulf %64, %68 : vector<2x32xf32>
    %71 = arith.addf %69, %70 : vector<2x32xf32>
    %72 = math.tanh %71 : vector<2x32xf32>
    %73 = arith.mulf %66, %72 : vector<2x32xf32>
    %74 = vector.extract_strided_slice %11 {offsets = [6, 0], sizes = [2, 128], strides = [1, 1]} : vector<16x128xf32> to vector<2x128xf32>
    %c0_26 = arith.constant 0 : index
    %c0_27 = arith.constant 0 : index
    %75 = vector.load %arg3[%c0_26, %c0_27] : memref<32x128xf32, #tpu.memory_space<vmem>>, vector<32x128xf32>
    %cst_28 = arith.constant dense<0.000000e+00> : vector<2x128xf32>
    %76 = tpu.matmul %73, %75, %cst_28 {dimension_numbers = #tpu.dot_dimension_numbers<[1], [0], [0], [1], [0, 0, 1, 1], [], []>} : vector<2x32xf32>, vector<32x128xf32>, vector<2x128xf32> -> vector<2x128xf32>
    %77 = arith.addf %74, %76 : vector<2x128xf32>
    %78 = vector.extract_strided_slice %77 {offsets = [0, 0], sizes = [2, 96], strides = [1, 1]} : vector<2x128xf32> to vector<2x96xf32>
    %79 = arith.negf %78 : vector<2x96xf32>
    %80 = math.exp %79 : vector<2x96xf32>
    %cst_29 = arith.constant 1.000000e+00 : f32
    %81 = vector.broadcast %cst_29 : f32 to vector<2x96xf32>
    %82 = arith.addf %81, %80 : vector<2x96xf32>
    %83 = arith.divf %81, %82 : vector<2x96xf32>
    %84 = vector.extract_strided_slice %83 {offsets = [0, 0], sizes = [2, 32], strides = [1, 1]} : vector<2x96xf32> to vector<2x32xf32>
    %85 = vector.extract_strided_slice %83 {offsets = [0, 32], sizes = [2, 32], strides = [1, 1]} : vector<2x96xf32> to vector<2x32xf32>
    %86 = vector.extract_strided_slice %83 {offsets = [0, 64], sizes = [2, 32], strides = [1, 1]} : vector<2x96xf32> to vector<2x32xf32>
    %87 = vector.extract_strided_slice %77 {offsets = [0, 96], sizes = [2, 32], strides = [1, 1]} : vector<2x128xf32> to vector<2x32xf32>
    %88 = math.tanh %87 : vector<2x32xf32>
    %89 = arith.mulf %85, %71 : vector<2x32xf32>
    %90 = arith.mulf %84, %88 : vector<2x32xf32>
    %91 = arith.addf %89, %90 : vector<2x32xf32>
    %92 = math.tanh %91 : vector<2x32xf32>
    %93 = arith.mulf %86, %92 : vector<2x32xf32>
    %94 = vector.extract_strided_slice %11 {offsets = [8, 0], sizes = [2, 128], strides = [1, 1]} : vector<16x128xf32> to vector<2x128xf32>
    %c0_30 = arith.constant 0 : index
    %c0_31 = arith.constant 0 : index
    %95 = vector.load %arg3[%c0_30, %c0_31] : memref<32x128xf32, #tpu.memory_space<vmem>>, vector<32x128xf32>
    %cst_32 = arith.constant dense<0.000000e+00> : vector<2x128xf32>
    %96 = tpu.matmul %93, %95, %cst_32 {dimension_numbers = #tpu.dot_dimension_numbers<[1], [0], [0], [1], [0, 0, 1, 1], [], []>} : vector<2x32xf32>, vector<32x128xf32>, vector<2x128xf32> -> vector<2x128xf32>
    %97 = arith.addf %94, %96 : vector<2x128xf32>
    %98 = vector.extract_strided_slice %97 {offsets = [0, 0], sizes = [2, 96], strides = [1, 1]} : vector<2x128xf32> to vector<2x96xf32>
    %99 = arith.negf %98 : vector<2x96xf32>
    %100 = math.exp %99 : vector<2x96xf32>
    %cst_33 = arith.constant 1.000000e+00 : f32
    %101 = vector.broadcast %cst_33 : f32 to vector<2x96xf32>
    %102 = arith.addf %101, %100 : vector<2x96xf32>
    %103 = arith.divf %101, %102 : vector<2x96xf32>
    %104 = vector.extract_strided_slice %103 {offsets = [0, 0], sizes = [2, 32], strides = [1, 1]} : vector<2x96xf32> to vector<2x32xf32>
    %105 = vector.extract_strided_slice %103 {offsets = [0, 32], sizes = [2, 32], strides = [1, 1]} : vector<2x96xf32> to vector<2x32xf32>
    %106 = vector.extract_strided_slice %103 {offsets = [0, 64], sizes = [2, 32], strides = [1, 1]} : vector<2x96xf32> to vector<2x32xf32>
    %107 = vector.extract_strided_slice %97 {offsets = [0, 96], sizes = [2, 32], strides = [1, 1]} : vector<2x128xf32> to vector<2x32xf32>
    %108 = math.tanh %107 : vector<2x32xf32>
    %109 = arith.mulf %105, %91 : vector<2x32xf32>
    %110 = arith.mulf %104, %108 : vector<2x32xf32>
    %111 = arith.addf %109, %110 : vector<2x32xf32>
    %112 = math.tanh %111 : vector<2x32xf32>
    %113 = arith.mulf %106, %112 : vector<2x32xf32>
    %114 = vector.extract_strided_slice %11 {offsets = [10, 0], sizes = [2, 128], strides = [1, 1]} : vector<16x128xf32> to vector<2x128xf32>
    %c0_34 = arith.constant 0 : index
    %c0_35 = arith.constant 0 : index
    %115 = vector.load %arg3[%c0_34, %c0_35] : memref<32x128xf32, #tpu.memory_space<vmem>>, vector<32x128xf32>
    %cst_36 = arith.constant dense<0.000000e+00> : vector<2x128xf32>
    %116 = tpu.matmul %113, %115, %cst_36 {dimension_numbers = #tpu.dot_dimension_numbers<[1], [0], [0], [1], [0, 0, 1, 1], [], []>} : vector<2x32xf32>, vector<32x128xf32>, vector<2x128xf32> -> vector<2x128xf32>
    %117 = arith.addf %114, %116 : vector<2x128xf32>
    %118 = vector.extract_strided_slice %117 {offsets = [0, 0], sizes = [2, 96], strides = [1, 1]} : vector<2x128xf32> to vector<2x96xf32>
    %119 = arith.negf %118 : vector<2x96xf32>
    %120 = math.exp %119 : vector<2x96xf32>
    %cst_37 = arith.constant 1.000000e+00 : f32
    %121 = vector.broadcast %cst_37 : f32 to vector<2x96xf32>
    %122 = arith.addf %121, %120 : vector<2x96xf32>
    %123 = arith.divf %121, %122 : vector<2x96xf32>
    %124 = vector.extract_strided_slice %123 {offsets = [0, 0], sizes = [2, 32], strides = [1, 1]} : vector<2x96xf32> to vector<2x32xf32>
    %125 = vector.extract_strided_slice %123 {offsets = [0, 32], sizes = [2, 32], strides = [1, 1]} : vector<2x96xf32> to vector<2x32xf32>
    %126 = vector.extract_strided_slice %123 {offsets = [0, 64], sizes = [2, 32], strides = [1, 1]} : vector<2x96xf32> to vector<2x32xf32>
    %127 = vector.extract_strided_slice %117 {offsets = [0, 96], sizes = [2, 32], strides = [1, 1]} : vector<2x128xf32> to vector<2x32xf32>
    %128 = math.tanh %127 : vector<2x32xf32>
    %129 = arith.mulf %125, %111 : vector<2x32xf32>
    %130 = arith.mulf %124, %128 : vector<2x32xf32>
    %131 = arith.addf %129, %130 : vector<2x32xf32>
    %132 = math.tanh %131 : vector<2x32xf32>
    %133 = arith.mulf %126, %132 : vector<2x32xf32>
    %134 = vector.extract_strided_slice %11 {offsets = [12, 0], sizes = [2, 128], strides = [1, 1]} : vector<16x128xf32> to vector<2x128xf32>
    %c0_38 = arith.constant 0 : index
    %c0_39 = arith.constant 0 : index
    %135 = vector.load %arg3[%c0_38, %c0_39] : memref<32x128xf32, #tpu.memory_space<vmem>>, vector<32x128xf32>
    %cst_40 = arith.constant dense<0.000000e+00> : vector<2x128xf32>
    %136 = tpu.matmul %133, %135, %cst_40 {dimension_numbers = #tpu.dot_dimension_numbers<[1], [0], [0], [1], [0, 0, 1, 1], [], []>} : vector<2x32xf32>, vector<32x128xf32>, vector<2x128xf32> -> vector<2x128xf32>
    %137 = arith.addf %134, %136 : vector<2x128xf32>
    %138 = vector.extract_strided_slice %137 {offsets = [0, 0], sizes = [2, 96], strides = [1, 1]} : vector<2x128xf32> to vector<2x96xf32>
    %139 = arith.negf %138 : vector<2x96xf32>
    %140 = math.exp %139 : vector<2x96xf32>
    %cst_41 = arith.constant 1.000000e+00 : f32
    %141 = vector.broadcast %cst_41 : f32 to vector<2x96xf32>
    %142 = arith.addf %141, %140 : vector<2x96xf32>
    %143 = arith.divf %141, %142 : vector<2x96xf32>
    %144 = vector.extract_strided_slice %143 {offsets = [0, 0], sizes = [2, 32], strides = [1, 1]} : vector<2x96xf32> to vector<2x32xf32>
    %145 = vector.extract_strided_slice %143 {offsets = [0, 32], sizes = [2, 32], strides = [1, 1]} : vector<2x96xf32> to vector<2x32xf32>
    %146 = vector.extract_strided_slice %143 {offsets = [0, 64], sizes = [2, 32], strides = [1, 1]} : vector<2x96xf32> to vector<2x32xf32>
    %147 = vector.extract_strided_slice %137 {offsets = [0, 96], sizes = [2, 32], strides = [1, 1]} : vector<2x128xf32> to vector<2x32xf32>
    %148 = math.tanh %147 : vector<2x32xf32>
    %149 = arith.mulf %145, %131 : vector<2x32xf32>
    %150 = arith.mulf %144, %148 : vector<2x32xf32>
    %151 = arith.addf %149, %150 : vector<2x32xf32>
    %152 = math.tanh %151 : vector<2x32xf32>
    %153 = arith.mulf %146, %152 : vector<2x32xf32>
    %154 = vector.extract_strided_slice %11 {offsets = [14, 0], sizes = [2, 128], strides = [1, 1]} : vector<16x128xf32> to vector<2x128xf32>
    %c0_42 = arith.constant 0 : index
    %c0_43 = arith.constant 0 : index
    %155 = vector.load %arg3[%c0_42, %c0_43] : memref<32x128xf32, #tpu.memory_space<vmem>>, vector<32x128xf32>
    %cst_44 = arith.constant dense<0.000000e+00> : vector<2x128xf32>
    %156 = tpu.matmul %153, %155, %cst_44 {dimension_numbers = #tpu.dot_dimension_numbers<[1], [0], [0], [1], [0, 0, 1, 1], [], []>} : vector<2x32xf32>, vector<32x128xf32>, vector<2x128xf32> -> vector<2x128xf32>
    %157 = arith.addf %154, %156 : vector<2x128xf32>
    %158 = vector.extract_strided_slice %157 {offsets = [0, 0], sizes = [2, 96], strides = [1, 1]} : vector<2x128xf32> to vector<2x96xf32>
    %159 = arith.negf %158 : vector<2x96xf32>
    %160 = math.exp %159 : vector<2x96xf32>
    %cst_45 = arith.constant 1.000000e+00 : f32
    %161 = vector.broadcast %cst_45 : f32 to vector<2x96xf32>
    %162 = arith.addf %161, %160 : vector<2x96xf32>
    %163 = arith.divf %161, %162 : vector<2x96xf32>
    %164 = vector.extract_strided_slice %163 {offsets = [0, 0], sizes = [2, 32], strides = [1, 1]} : vector<2x96xf32> to vector<2x32xf32>
    %165 = vector.extract_strided_slice %163 {offsets = [0, 32], sizes = [2, 32], strides = [1, 1]} : vector<2x96xf32> to vector<2x32xf32>
    %166 = vector.extract_strided_slice %163 {offsets = [0, 64], sizes = [2, 32], strides = [1, 1]} : vector<2x96xf32> to vector<2x32xf32>
    %167 = vector.extract_strided_slice %157 {offsets = [0, 96], sizes = [2, 32], strides = [1, 1]} : vector<2x128xf32> to vector<2x32xf32>
    %168 = math.tanh %167 : vector<2x32xf32>
    %169 = arith.mulf %165, %151 : vector<2x32xf32>
    %170 = arith.mulf %164, %168 : vector<2x32xf32>
    %171 = arith.addf %169, %170 : vector<2x32xf32>
    %172 = math.tanh %171 : vector<2x32xf32>
    %173 = arith.mulf %166, %172 : vector<2x32xf32>
    %c0_46 = arith.constant 0 : index
    %c0_47 = arith.constant 0 : index
    %174 = vector.load %arg6[%c0_46, %c0_47] : memref<32x32xf32, #tpu.memory_space<vmem>>, vector<32x32xf32>
    %cst_48 = arith.constant dense<0.000000e+00> : vector<2x32xf32>
    %175 = tpu.matmul %173, %174, %cst_48 {dimension_numbers = #tpu.dot_dimension_numbers<[1], [0], [0], [1], [0, 0, 1, 1], [], []>} : vector<2x32xf32>, vector<32x32xf32>, vector<2x32xf32> -> vector<2x32xf32>
    %176 = arith.addf %5, %175 : vector<2x32xf32>
    %cst_49 = arith.constant 0.000000e+00 : f32
    %177 = vector.broadcast %cst_49 : f32 to vector<2x32xf32>
    %178 = arith.maximumf %176, %177 : vector<2x32xf32>
    %c0_50 = arith.constant 0 : index
    %c0_51 = arith.constant 0 : index
    %179 = vector.load %arg8[%c0_50, %c0_51] : memref<32x32xf32, #tpu.memory_space<vmem>>, vector<32x32xf32>
    %cst_52 = arith.constant dense<0.000000e+00> : vector<2x32xf32>
    %180 = tpu.matmul %178, %179, %cst_52 {dimension_numbers = #tpu.dot_dimension_numbers<[1], [0], [0], [1], [0, 0, 1, 1], [], []>} : vector<2x32xf32>, vector<32x32xf32>, vector<2x32xf32> -> vector<2x32xf32>
    %c0_53 = arith.constant 0 : index
    %c0_54 = arith.constant 0 : index
    %181 = vector.load %arg9[%c0_53, %c0_54] : memref<1x32xf32, #tpu.memory_space<vmem>>, vector<1x32xf32>
    %182 = vector.broadcast %181 : vector<1x32xf32> to vector<2x32xf32>
    %183 = arith.addf %180, %182 : vector<2x32xf32>
    %cst_55 = arith.constant 3.000000e+00 : f32
    %184 = vector.broadcast %cst_55 : f32 to vector<2x32xf32>
    %185 = arith.addf %183, %184 : vector<2x32xf32>
    %cst_56 = arith.constant 0.000000e+00 : f32
    %cst_57 = arith.constant 6.000000e+00 : f32
    %186 = vector.broadcast %cst_56 : f32 to vector<2x32xf32>
    %187 = arith.maximumf %186, %185 : vector<2x32xf32>
    %188 = vector.broadcast %cst_57 : f32 to vector<2x32xf32>
    %189 = arith.minimumf %188, %187 : vector<2x32xf32>
    %190 = arith.mulf %183, %189 : vector<2x32xf32>
    %cst_58 = arith.constant 0.166666672 : f32
    %191 = vector.broadcast %cst_58 : f32 to vector<2x32xf32>
    %192 = arith.mulf %190, %191 : vector<2x32xf32>
    %c0_59 = arith.constant 0 : index
    %c0_60 = arith.constant 0 : index
    %193 = vector.load %arg10[%c0_59, %c0_60] : memref<32x8xf32, #tpu.memory_space<vmem>>, vector<32x8xf32>
    %cst_61 = arith.constant dense<0.000000e+00> : vector<2x8xf32>
    %194 = tpu.matmul %192, %193, %cst_61 {dimension_numbers = #tpu.dot_dimension_numbers<[1], [0], [0], [1], [0, 0, 1, 1], [], []>} : vector<2x32xf32>, vector<32x8xf32>, vector<2x8xf32> -> vector<2x8xf32>
    %c0_62 = arith.constant 0 : index
    %c0_63 = arith.constant 0 : index
    %195 = vector.load %arg11[%c0_62, %c0_63] : memref<1x8xf32, #tpu.memory_space<vmem>>, vector<1x8xf32>
    %196 = vector.broadcast %195 : vector<1x8xf32> to vector<2x8xf32>
    %197 = arith.addf %194, %196 : vector<2x8xf32>
    %198 = tpu.iota {dimensions = array<i32: 1>} : vector<2x8xi32>
    %c4_i32 = arith.constant 4 : i32
    %199 = vector.broadcast %c4_i32 : i32 to vector<2x8xi32>
    %200 = arith.cmpi slt, %198, %199 : vector<2x8xi32>
    %201 = math.tanh %197 : vector<2x8xf32>
    %202 = math.exp %197 : vector<2x8xf32>
    %203 = arith.select %200, %201, %202 : vector<2x8xi1>, vector<2x8xf32>
    %c0_64 = arith.constant 0 : index
    %c0_65 = arith.constant 0 : index
    %204 = vector.load %arg12[%c0_64, %c0_65] : memref<2x8xf32, #tpu.memory_space<vmem>>, vector<2x8xf32>
    tpu.vector_store %arg12[%c0_64, %c0_65], %203 {strides = array<i32>} : memref<2x8xf32, #tpu.memory_space<vmem>>, vector<2x8xf32>,
    return
  }
}

</mosaic_0001>

<llo_original>
// kernel: tpu_custom_call.1
$region0: #{tpu_custom_call.1}
  #allocation0 [shape = 'u32[]', space=smem, size = 0x4, offset = 0x4, fixed_abs, tag = 'smem constant byte address 0x4 - core index']
  #allocation1 [shape = 'u32[144,128]{1,0:T(1,128)}', space=vmem, size = 0x12000, scoped, tag = 'internal scratch']
  %s0 = inlined_call_operand.hbm [shape: f32[2,16], index: 0, kind: input, shape index: {}]
  %s1 = inlined_call_operand.vmem [shape: f32[16,8], index: 1, kind: input, shape index: {}]
  %s2 = inlined_call_operand.hbm [shape: f32[8,128], index: 2, kind: input, shape index: {}]
  %s3 = inlined_call_operand.vmem [shape: f32[32,128], index: 3, kind: input, shape index: {}]
  %s4 = inlined_call_operand.vmem [shape: f32[1,128], index: 4, kind: input, shape index: {}]
  %s5 = inlined_call_operand.hbm [shape: f32[16,32], index: 5, kind: input, shape index: {}]
  %s6 = inlined_call_operand.vmem [shape: f32[32,32], index: 6, kind: input, shape index: {}]
  %s7 = inlined_call_operand.vmem [shape: f32[1,32], index: 7, kind: input, shape index: {}]
  %s8 = inlined_call_operand.hbm [shape: f32[32,32], index: 8, kind: input, shape index: {}]
  %s9 = inlined_call_operand.vmem [shape: f32[1,32], index: 9, kind: input, shape index: {}]
  %s10 = inlined_call_operand.vmem [shape: f32[32,8], index: 10, kind: input, shape index: {}]
  %s11 = inlined_call_operand.vmem [shape: f32[1,8], index: 11, kind: input, shape index: {}]
  %s12 = inlined_call_operand.hbm [shape: f32[2,8], index: 12, kind: output, shape index: {}]
  %s13 = sld [smem:[#allocation0]]
  $region74: #{tpu_custom_call.1} parent=0
    _
  %s15 = ssub.s32 1, %s13
  %s16 = scalar_select 0, %s15, %s13
  $region1: #{tpu_custom_call.1} parent=0
    #allocation2 [shape = 'u8[1024]{0}', space=vmem, size = 0x400, scoped, tag = 'input window, operand 0, single buffered']
    #allocation3 [shape = 's32[1]{0}', space=sflag, size = 0x4, scoped, tag = 'scoped memory for tpu_custom_call.1']
    #allocation4 [shape = 's32[1]{0}', space=sflag, size = 0x4, scoped, tag = 'scoped memory for tpu_custom_call.1']
    #allocation5 [shape = 'u8[4096]{0}', space=vmem, size = 0x1000, scoped, tag = 'input window, operand 2, single buffered']
    #allocation6 [shape = 's32[1]{0}', space=sflag, size = 0x4, scoped, tag = 'scoped memory for tpu_custom_call.1']
    #allocation7 [shape = 'u8[8192]{0}', space=vmem, size = 0x2000, scoped, tag = 'input window, operand 5, single buffered']
    #allocation8 [shape = 'u8[16384]{0}', space=vmem, size = 0x4000, scoped, tag = 'input window, operand 8, single buffered']
    #allocation9 [shape = 's32[1]{0}', space=sflag, size = 0x4, scoped, tag = 'scoped memory for tpu_custom_call.1']
    #allocation10 [shape = 'u8[1024]{0}', space=vmem, size = 0x400, scoped, tag = 'output window, operand 0, single buffered']
    %17 = vsyncpa [#allocation3], 0
    %18 = vsyncpa [#allocation6], 0
    %19 = vsyncpa [#allocation9], 0
    %20 = vsyncpa [#allocation4], 0
    // Predicated region
    $region2: #{tpu_custom_call.1} parent=1 // pred_check
      _
    $region3: #{tpu_custom_call.1} parent=1 // pred_check_branch
      %22 = sbr.rel (0) target = $region5
    $region4: #{tpu_custom_call.1} parent=1 // pred_region
      %s24 = ssub.s32 32, 32
      %25 = vsyncadd [#allocation3], %s24
      %s27 = sshll.u32 [#allocation2], 4
      %s28 = int_to_ptr.vmem [resolvable:$true] %s27
      %30 = dma.hbm_to_vmem [thread:$0]  %s0, 32, %s28, [#allocation3]
    $region5: #{tpu_custom_call.1} parent=1 // pred_fallthru
      _
    // Predicated region
    $region6: #{tpu_custom_call.1} parent=1 // pred_check
      _
    $region7: #{tpu_custom_call.1} parent=1 // pred_check_branch
      %32 = sbr.rel (0) target = $region9
    $region8: #{tpu_custom_call.1} parent=1 // pred_region
      _
    $region9: #{tpu_custom_call.1} parent=1 // pred_fallthru
      _
    // Predicated region
    $region10: #{tpu_custom_call.1} parent=1 // pred_check
      _
    $region11: #{tpu_custom_call.1} parent=1 // pred_check_branch
      %34 = sbr.rel (0) target = $region13
    $region12: #{tpu_custom_call.1} parent=1 // pred_region
      %s36 = ssub.s32 128, 128
      %37 = vsyncadd [#allocation6], %s36
      %s39 = sshll.u32 [#allocation5], 4
      %s40 = int_to_ptr.vmem [resolvable:$true] %s39
      %42 = dma.hbm_to_vmem [thread:$0]  %s2, 128, %s40, [#allocation6]
    $region13: #{tpu_custom_call.1} parent=1 // pred_fallthru
      _
    // Predicated region
    $region14: #{tpu_custom_call.1} parent=1 // pred_check
      _
    $region15: #{tpu_custom_call.1} parent=1 // pred_check_branch
      %44 = sbr.rel (0) target = $region17
    $region16: #{tpu_custom_call.1} parent=1 // pred_region
      _
    $region17: #{tpu_custom_call.1} parent=1 // pred_fallthru
      _
    // Predicated region
    $region18: #{tpu_custom_call.1} parent=1 // pred_check
      _
    $region19: #{tpu_custom_call.1} parent=1 // pred_check_branch
      %46 = sbr.rel (0) target = $region21
    $region20: #{tpu_custom_call.1} parent=1 // pred_region
      _
    $region21: #{tpu_custom_call.1} parent=1 // pred_fallthru
      _
    // Predicated region
    $region22: #{tpu_custom_call.1} parent=1 // pred_check
      _
    $region23: #{tpu_custom_call.1} parent=1 // pred_check_branch
      %48 = sbr.rel (0) target = $region25
    $region24: #{tpu_custom_call.1} parent=1 // pred_region
      %s50 = ssub.s32 256, 256
      %51 = vsyncadd [#allocation6], %s50
      %s52 = sshll.u32 [#allocation7], 4
      %s53 = int_to_ptr.vmem [resolvable:$true] %s52
      %58 = dma.hbm_to_vmem [thread:$0]  %s5, 256, %s53, [#allocation6], 128, 128, 8
    $region25: #{tpu_custom_call.1} parent=1 // pred_fallthru
      _
    // Predicated region
    $region26: #{tpu_custom_call.1} parent=1 // pred_check
      _
    $region27: #{tpu_custom_call.1} parent=1 // pred_check_branch
      %60 = sbr.rel (0) target = $region29
    $region28: #{tpu_custom_call.1} parent=1 // pred_region
      _
    $region29: #{tpu_custom_call.1} parent=1 // pred_fallthru
      _
    // Predicated region
    $region30: #{tpu_custom_call.1} parent=1 // pred_check
      _
    $region31: #{tpu_custom_call.1} parent=1 // pred_check_branch
      %62 = sbr.rel (0) target = $region33
    $region32: #{tpu_custom_call.1} parent=1 // pred_region
      _
    $region33: #{tpu_custom_call.1} parent=1 // pred_fallthru
      _
    // Predicated region
    $region34: #{tpu_custom_call.1} parent=1 // pred_check
      _
    $region35: #{tpu_custom_call.1} parent=1 // pred_check_branch
      %64 = sbr.rel (0) target = $region37
    $region36: #{tpu_custom_call.1} parent=1 // pred_region
      %s66 = ssub.s32 512, 512
      %67 = vsyncadd [#allocation9], %s66
      %s68 = sshll.u32 [#allocation8], 4
      %s69 = int_to_ptr.vmem [resolvable:$true] %s68
      %74 = dma.hbm_to_vmem [thread:$0]  %s8, 512, %s69, [#allocation9], 128, 128, 8
    $region37: #{tpu_custom_call.1} parent=1 // pred_fallthru
      _
    // Predicated region
    $region38: #{tpu_custom_call.1} parent=1 // pred_check
      _
    $region39: #{tpu_custom_call.1} parent=1 // pred_check_branch
      %76 = sbr.rel (0) target = $region41
    $region40: #{tpu_custom_call.1} parent=1 // pred_region
      _
    $region41: #{tpu_custom_call.1} parent=1 // pred_fallthru
      _
    // Predicated region
    $region42: #{tpu_custom_call.1} parent=1 // pred_check
      _
    $region43: #{tpu_custom_call.1} parent=1 // pred_check_branch
      %78 = sbr.rel (0) target = $region45
    $region44: #{tpu_custom_call.1} parent=1 // pred_region
      _
    $region45: #{tpu_custom_call.1} parent=1 // pred_fallthru
      _
    // Predicated region
    $region46: #{tpu_custom_call.1} parent=1 // pred_check
      _
    $region47: #{tpu_custom_call.1} parent=1 // pred_check_branch
      %80 = sbr.rel (0) target = $region49
    $region48: #{tpu_custom_call.1} parent=1 // pred_region
      _
    $region49: #{tpu_custom_call.1} parent=1 // pred_fallthru
      _
    // Predicated region
    $region50: #{tpu_custom_call.1} parent=1 // pred_check
      _
    $region51: #{tpu_custom_call.1} parent=1 // pred_check_branch
      %82 = sbr.rel (0) target = $region53
    $region52: #{tpu_custom_call.1} parent=1 // pred_region
      %83 = dma.done [#allocation3], 32
    $region53: #{tpu_custom_call.1} parent=1 // pred_fallthru
      _
    // Predicated region
    $region54: #{tpu_custom_call.1} parent=1 // pred_check
      _
    $region55: #{tpu_custom_call.1} parent=1 // pred_check_branch
      %85 = sbr.rel (0) target = $region57
    $region56: #{tpu_custom_call.1} parent=1 // pred_region
      %86 = dma.done [#allocation6], 128
    $region57: #{tpu_custom_call.1} parent=1 // pred_fallthru
      _
    // Predicated region
    $region58: #{tpu_custom_call.1} parent=1 // pred_check
      _
    $region59: #{tpu_custom_call.1} parent=1 // pred_check_branch
      %88 = sbr.rel (0) target = $region61
    $region60: #{tpu_custom_call.1} parent=1 // pred_region
      %89 = dma.done [#allocation6], 256
    $region61: #{tpu_custom_call.1} parent=1 // pred_fallthru
      _
    // Predicated region
    $region62: #{tpu_custom_call.1} parent=1 // pred_check
      _
    $region63: #{tpu_custom_call.1} parent=1 // pred_check_branch
      %91 = sbr.rel (0) target = $region65
    $region64: #{tpu_custom_call.1} parent=1 // pred_region
      %92 = dma.done [#allocation9], 512
    $region65: #{tpu_custom_call.1} parent=1 // pred_fallthru
      _
    %v93 = vld [vmem:[#allocation2] sm:$0x3]
    %v94 = vld [vmem:[#allocation7] sm:$0xff]
    %v95 = vld [vmem:[#allocation7 + $0x8] sm:$0xff]
    %v96 = vld [vmem:[%s7] sm:$0x1]
    %v98 = vlaneseq
    %v99 = vshrl.u32 %v98, 7
    %v100 = vsub.s32 0, %v99
    %v101 = vrot.slane %v96, %v100
    %vm103 = vcmask 130048
    %v105 = vsel %vm103, %v93, 0
    %107 = vmatprep.subr.mxu0 0.0
    %108 = vmatpush1.msra.mxu0 0.0
    %109 = vmatprep.subr.mxu0 0.0
    %110 = vmatpush1.msra.mxu0 0.0
    %111 = vmatprep.subr.mxu0 0.0
    %112 = vmatpush1.msra.mxu0 0.0
    %113 = vmatprep.subr.mxu0 0.0
    %114 = vmatpush1.msra.mxu0 0.0
    %115 = vmatprep.subr.mxu0 0.0
    %116 = vmatpush1.msra.mxu0 0.0
    %117 = vmatprep.subr.mxu0 0.0
    %118 = vmatpush1.msra.mxu0 0.0
    %119 = vmatprep.subr.mxu0 0.0
    %120 = vmatpush1.msra.mxu0 0.0
    %121 = vmatprep.subr.mxu0 0.0
    %122 = vmatpush1.msra.mxu0 0.0
    %123 = vmatprep.subr.mxu0 0.0
    %124 = vmatpush1.msra.mxu0 0.0
    %125 = vmatprep.subr.mxu0 0.0
    %126 = vmatpush1.msra.mxu0 0.0
    %127 = vmatprep.subr.mxu0 0.0
    %128 = vmatpush1.msra.mxu0 0.0
    %129 = vmatprep.subr.mxu0 0.0
    %130 = vmatpush1.msra.mxu0 0.0
    %131 = vmatprep.subr.mxu0 0.0
    %132 = vmatpush1.msra.mxu0 0.0
    %133 = vmatprep.subr.mxu0 0.0
    %134 = vmatpush1.msra.mxu0 0.0
    %135 = vmatprep.subr.mxu0 0.0
    %136 = vmatpush1.msra.mxu0 %v95
    %137 = vmatprep.subr.mxu0 0.0
    %138 = vmatpush1.msra.mxu0 %v94
    %139 = vmatprep.subr.mxu0 0.0
    %140 = vmatpush2.msra.mxu0 0.0
    %141 = vmatprep.subr.mxu0 0.0
    %142 = vmatpush2.msra.mxu0 0.0
    %143 = vmatprep.subr.mxu0 0.0
    %144 = vmatpush2.msra.mxu0 0.0
    %145 = vmatprep.subr.mxu0 0.0
    %146 = vmatpush2.msra.mxu0 0.0
    %147 = vmatprep.subr.mxu0 0.0
    %148 = vmatpush2.msra.mxu0 0.0
    %149 = vmatprep.subr.mxu0 0.0
    %150 = vmatpush2.msra.mxu0 0.0
    %151 = vmatprep.subr.mxu0 0.0
    %152 = vmatpush2.msra.mxu0 0.0
    %153 = vmatprep.subr.mxu0 0.0
    %154 = vmatpush2.msra.mxu0 0.0
    %155 = vmatprep.subr.mxu0 0.0
    %156 = vmatpush2.msra.mxu0 0.0
    %157 = vmatprep.subr.mxu0 0.0
    %158 = vmatpush2.msra.mxu0 0.0
    %159 = vmatprep.subr.mxu0 0.0
    %160 = vmatpush2.msra.mxu0 0.0
    %161 = vmatprep.subr.mxu0 0.0
    %162 = vmatpush2.msra.mxu0 0.0
    %163 = vmatprep.subr.mxu0 0.0
    %164 = vmatpush2.msra.mxu0 0.0
    %165 = vmatprep.subr.mxu0 0.0
    %166 = vmatpush2.msra.mxu0 0.0
    %167 = vmatprep.subr.mxu0 0.0
    %168 = vmatpush2.msra.mxu0 0.0
    %169 = vmatprep.subr.mxu0 0.0
    %170 = vmatpush2.msra.mxu0 0.0
    %171 = vmatprep.mubr.f32.mxu0 0.0
    %172 = vmatmul.mubr.f32.gmra.mxu0 %v105
    %v173 = vpop.f32.mrf.mxu0
    %v174 = vadd.f32 %v101, %v173
    %v175 = vpop.f32.mrf.mxu0
    %176 = vdwg.mxu0
    %v177 = vld [vmem:[%s1] sm:$0xff]
    %v178 = vld [vmem:[%s1 + $0x8] sm:$0xff]
    %v179 = vld [vmem:[#allocation5] sm:$0xff]
    %v180 = vld [vmem:[%s4] sm:$0x1]
    %v182 = vlaneseq
    %v183 = vshrl.u32 %v182, 7
    %v184 = vsub.s32 0, %v183
    %v185 = vrot.slane %v180, %v184
    %vm187 = vcmask 64512
    %v189 = vsel %vm187, %v177, 0
    %v192 = vsel %vm187, %v178, 0
    %194 = vmatprep.subr.mxu0 0.0
    %195 = vmatpush1.msra.mxu0 0.0
    %196 = vmatprep.subr.mxu0 0.0
    %197 = vmatpush1.msra.mxu0 0.0
    %198 = vmatprep.subr.mxu0 0.0
    %199 = vmatpush1.msra.mxu0 0.0
    %200 = vmatprep.subr.mxu0 0.0
    %201 = vmatpush1.msra.mxu0 0.0
    %202 = vmatprep.subr.mxu0 0.0
    %203 = vmatpush1.msra.mxu0 0.0
    %204 = vmatprep.subr.mxu0 0.0
    %205 = vmatpush1.msra.mxu0 0.0
    %206 = vmatprep.subr.mxu0 0.0
    %207 = vmatpush1.msra.mxu0 0.0
    %208 = vmatprep.subr.mxu0 0.0
    %209 = vmatpush1.msra.mxu0 0.0
    %210 = vmatprep.subr.mxu0 0.0
    %211 = vmatpush1.msra.mxu0 0.0
    %212 = vmatprep.subr.mxu0 0.0
    %213 = vmatpush1.msra.mxu0 0.0
    %214 = vmatprep.subr.mxu0 0.0
    %215 = vmatpush1.msra.mxu0 0.0
    %216 = vmatprep.subr.mxu0 0.0
    %217 = vmatpush1.msra.mxu0 0.0
    %218 = vmatprep.subr.mxu0 0.0
    %219 = vmatpush1.msra.mxu0 0.0
    %220 = vmatprep.subr.mxu0 0.0
    %221 = vmatpush1.msra.mxu0 0.0
    %222 = vmatprep.subr.mxu0 0.0
    %223 = vmatpush1.msra.mxu0 0.0
    %224 = vmatprep.subr.mxu0 0.0
    %225 = vmatpush1.msra.mxu0 %v179
    %226 = vmatprep.subr.mxu0 0.0
    %227 = vmatpush2.msra.mxu0 0.0
    %228 = vmatprep.subr.mxu0 0.0
    %229 = vmatpush2.msra.mxu0 0.0
    %230 = vmatprep.subr.mxu0 0.0
    %231 = vmatpush2.msra.mxu0 0.0
    %232 = vmatprep.subr.mxu0 0.0
    %233 = vmatpush2.msra.mxu0 0.0
    %234 = vmatprep.subr.mxu0 0.0
    %235 = vmatpush2.msra.mxu0 0.0
    %236 = vmatprep.subr.mxu0 0.0
    %237 = vmatpush2.msra.mxu0 0.0
    %238 = vmatprep.subr.mxu0 0.0
    %239 = vmatpush2.msra.mxu0 0.0
    %240 = vmatprep.subr.mxu0 0.0
    %241 = vmatpush2.msra.mxu0 0.0
    %242 = vmatprep.subr.mxu0 0.0
    %243 = vmatpush2.msra.mxu0 0.0
    %244 = vmatprep.subr.mxu0 0.0
    %245 = vmatpush2.msra.mxu0 0.0
    %246 = vmatprep.subr.mxu0 0.0
    %247 = vmatpush2.msra.mxu0 0.0
    %248 = vmatprep.subr.mxu0 0.0
    %249 = vmatpush2.msra.mxu0 0.0
    %250 = vmatprep.subr.mxu0 0.0
    %251 = vmatpush2.msra.mxu0 0.0
    %252 = vmatprep.subr.mxu0 0.0
    %253 = vmatpush2.msra.mxu0 0.0
    %254 = vmatprep.subr.mxu0 0.0
    %255 = vmatpush2.msra.mxu0 0.0
    %256 = vmatprep.subr.mxu0 0.0
    %257 = vmatpush2.msra.mxu0 0.0
    %258 = vmatprep.mubr.f32.mxu0 0.0
    %259 = vmatmul.mubr.f32.gmra.mxu0 %v189
    %v260 = vpop.f32.mrf.mxu0
    %v261 = vadd.f32 %v185, %v260
    %v262 = vpop.f32.mrf.mxu0
    %263 = vmatprep.mubr.f32.mxu0 0.0
    %264 = vmatmul.mubr.f32.gmra.mxu0 %v192
    %v265 = vpop.f32.mrf.mxu0
    %v266 = vadd.f32 %v185, %v265
    %v267 = vpop.f32.mrf.mxu0
    %268 = vdwg.mxu0
    %v269 = vld [vmem:[%s3] sm:$0xff]
    %v270 = vld [vmem:[%s3 + $0x8] sm:$0xff]
    %v271 = vld [vmem:[%s3 + $0x10] sm:$0xff]
    %v272 = vld [vmem:[%s3 + $0x18] sm:$0xff]
    %vm273 = vcmask 261120
    %v275 = vsel %vm273, 0.0, 0
    %277 = vmatprep.subr.mxu0 0.0
    %278 = vmatpush1.msra.mxu0 0.0
    %279 = vmatprep.subr.mxu0 0.0
    %280 = vmatpush1.msra.mxu0 0.0
    %281 = vmatprep.subr.mxu0 0.0
    %282 = vmatpush1.msra.mxu0 0.0
    %283 = vmatprep.subr.mxu0 0.0
    %284 = vmatpush1.msra.mxu0 0.0
    %285 = vmatprep.subr.mxu0 0.0
    %286 = vmatpush1.msra.mxu0 0.0
    %287 = vmatprep.subr.mxu0 0.0
    %288 = vmatpush1.msra.mxu0 0.0
    %289 = vmatprep.subr.mxu0 0.0
    %290 = vmatpush1.msra.mxu0 0.0
    %291 = vmatprep.subr.mxu0 0.0
    %292 = vmatpush1.msra.mxu0 0.0
    %293 = vmatprep.subr.mxu0 0.0
    %294 = vmatpush1.msra.mxu0 0.0
    %295 = vmatprep.subr.mxu0 0.0
    %296 = vmatpush1.msra.mxu0 0.0
    %297 = vmatprep.subr.mxu0 0.0
    %298 = vmatpush1.msra.mxu0 0.0
    %299 = vmatprep.subr.mxu0 0.0
    %300 = vmatpush1.msra.mxu0 0.0
    %301 = vmatprep.subr.mxu0 0.0
    %302 = vmatpush1.msra.mxu0 %v272
    %303 = vmatprep.subr.mxu0 0.0
    %304 = vmatpush1.msra.mxu0 %v271
    %305 = vmatprep.subr.mxu0 0.0
    %306 = vmatpush1.msra.mxu0 %v270
    %307 = vmatprep.subr.mxu0 0.0
    %308 = vmatpush1.msra.mxu0 %v269
    %309 = vmatprep.subr.mxu0 0.0
    %310 = vmatpush2.msra.mxu0 0.0
    %311 = vmatprep.subr.mxu0 0.0
    %312 = vmatpush2.msra.mxu0 0.0
    %313 = vmatprep.subr.mxu0 0.0
    %314 = vmatpush2.msra.mxu0 0.0
    %315 = vmatprep.subr.mxu0 0.0
    %316 = vmatpush2.msra.mxu0 0.0
    %317 = vmatprep.subr.mxu0 0.0
    %318 = vmatpush2.msra.mxu0 0.0
    %319 = vmatprep.subr.mxu0 0.0
    %320 = vmatpush2.msra.mxu0 0.0
    %321 = vmatprep.subr.mxu0 0.0
    %322 = vmatpush2.msra.mxu0 0.0
    %323 = vmatprep.subr.mxu0 0.0
    %324 = vmatpush2.msra.mxu0 0.0
    %325 = vmatprep.subr.mxu0 0.0
    %326 = vmatpush2.msra.mxu0 0.0
    %327 = vmatprep.subr.mxu0 0.0
    %328 = vmatpush2.msra.mxu0 0.0
    %329 = vmatprep.subr.mxu0 0.0
    %330 = vmatpush2.msra.mxu0 0.0
    %331 = vmatprep.subr.mxu0 0.0
    %332 = vmatpush2.msra.mxu0 0.0
    %333 = vmatprep.subr.mxu0 0.0
    %334 = vmatpush2.msra.mxu0 0.0
    %335 = vmatprep.subr.mxu0 0.0
    %336 = vmatpush2.msra.mxu0 0.0
    %337 = vmatprep.subr.mxu0 0.0
    %338 = vmatpush2.msra.mxu0 0.0
    %339 = vmatprep.subr.mxu0 0.0
    %340 = vmatpush2.msra.mxu0 0.0
    %341 = vmatprep.mubr.f32.mxu0 0.0
    %342 = vmatmul.mubr.f32.gmra.mxu0 %v275
    %v343 = vpop.f32.mrf.mxu0
    %v344 = vadd.f32 0.0, %v343
    %v345 = vpop.f32.mrf.mxu0
    %346 = vdwg.mxu0
    %v347 = vadd.f32 %v261, %v344
    %v348 = vxor.u32 %v347, 2147483648
    %v349 = vmul.f32 %v348, 1.442695
    %v350 = vpow.pop %v349
    %v351 = vadd.f32 %v350, 1.0
    %v352 = vrcp.pop %v351
    %v353 = vmul.f32 1.0, %v352
    %v354 = vtanh.pop %v347
    %v355 = vmul.f32 %v353, 0.0
    %357 = vrot.lane.b32.xlu0 %v354, 32
    %v358 = vpop.permute.xlu0 %357
    %v360 = vmul.f32 %v353, %v358
    %362 = vrot.lane.b32.xlu0 %v360, 32
    %v363 = vpop.permute.xlu0 %362
    %v365 = vadd.f32 %v355, %v363
    %v366 = vtanh.pop %v365
    %368 = vrot.lane.b32.xlu0 %v366, 32
    %v369 = vpop.permute.xlu0 %368
    %v371 = vmul.f32 %v353, %v369
    %373 = vrot.lane.b32.xlu0 %v371, 64
    %v374 = vpop.permute.xlu0 %373
    %v375 = vsel %vm273, %v374, 0
    %377 = vmatprep.subr.mxu0 0.0
    %378 = vmatpush1.msra.mxu0 0.0
    %379 = vmatprep.subr.mxu0 0.0
    %380 = vmatpush1.msra.mxu0 0.0
    %381 = vmatprep.subr.mxu0 0.0
    %382 = vmatpush1.msra.mxu0 0.0
    %383 = vmatprep.subr.mxu0 0.0
    %384 = vmatpush1.msra.mxu0 0.0
    %385 = vmatprep.subr.mxu0 0.0
    %386 = vmatpush1.msra.mxu0 0.0
    %387 = vmatprep.subr.mxu0 0.0
    %388 = vmatpush1.msra.mxu0 0.0
    %389 = vmatprep.subr.mxu0 0.0
    %390 = vmatpush1.msra.mxu0 0.0
    %391 = vmatprep.subr.mxu0 0.0
    %392 = vmatpush1.msra.mxu0 0.0
    %393 = vmatprep.subr.mxu0 0.0
    %394 = vmatpush1.msra.mxu0 0.0
    %395 = vmatprep.subr.mxu0 0.0
    %396 = vmatpush1.msra.mxu0 0.0
    %397 = vmatprep.subr.mxu0 0.0
    %398 = vmatpush1.msra.mxu0 0.0
    %399 = vmatprep.subr.mxu0 0.0
    %400 = vmatpush1.msra.mxu0 0.0
    %401 = vmatprep.subr.mxu0 0.0
    %402 = vmatpush1.msra.mxu0 %v272
    %403 = vmatprep.subr.mxu0 0.0
    %404 = vmatpush1.msra.mxu0 %v271
    %405 = vmatprep.subr.mxu0 0.0
    %406 = vmatpush1.msra.mxu0 %v270
    %407 = vmatprep.subr.mxu0 0.0
    %408 = vmatpush1.msra.mxu0 %v269
    %409 = vmatprep.subr.mxu0 0.0
    %410 = vmatpush2.msra.mxu0 0.0
    %411 = vmatprep.subr.mxu0 0.0
    %412 = vmatpush2.msra.mxu0 0.0
    %413 = vmatprep.subr.mxu0 0.0
    %414 = vmatpush2.msra.mxu0 0.0
    %415 = vmatprep.subr.mxu0 0.0
    %416 = vmatpush2.msra.mxu0 0.0
    %417 = vmatprep.subr.mxu0 0.0
    %418 = vmatpush2.msra.mxu0 0.0
    %419 = vmatprep.subr.mxu0 0.0
    %420 = vmatpush2.msra.mxu0 0.0
    %421 = vmatprep.subr.mxu0 0.0
    %422 = vmatpush2.msra.mxu0 0.0
    %423 = vmatprep.subr.mxu0 0.0
    %424 = vmatpush2.msra.mxu0 0.0
    %425 = vmatprep.subr.mxu0 0.0
    %426 = vmatpush2.msra.mxu0 0.0
    %427 = vmatprep.subr.mxu0 0.0
    %428 = vmatpush2.msra.mxu0 0.0
    %429 = vmatprep.subr.mxu0 0.0
    %430 = vmatpush2.msra.mxu0 0.0
    %431 = vmatprep.subr.mxu0 0.0
    %432 = vmatpush2.msra.mxu0 0.0
    %433 = vmatprep.subr.mxu0 0.0
    %434 = vmatpush2.msra.mxu0 0.0
    %435 = vmatprep.subr.mxu0 0.0
    %436 = vmatpush2.msra.mxu0 0.0
    %437 = vmatprep.subr.mxu0 0.0
    %438 = vmatpush2.msra.mxu0 0.0
    %439 = vmatprep.subr.mxu0 0.0
    %440 = vmatpush2.msra.mxu0 0.0
    %441 = vmatprep.mubr.f32.mxu0 0.0
    %442 = vmatmul.mubr.f32.gmra.mxu0 %v375
    %v443 = vpop.f32.mrf.mxu0
    %v444 = vadd.f32 0.0, %v443
    %v445 = vpop.f32.mrf.mxu0
    %446 = vdwg.mxu0
    %v448 = vrot.slane %v444, 6
    %v450 = vadd.f32 %v261, %v448
    %v451 = vxor.u32 %v450, 2147483648
    %v452 = vmul.f32 %v451, 1.442695
    %v453 = vpow.pop %v452
    %v454 = vadd.f32 %v453, 1.0
    %v455 = vrcp.pop %v454
    %v456 = vmul.f32 1.0, %v455
    %v457 = vtanh.pop %v450
    %v459 = vrot.slane %v365, 6
    %v461 = vmul.f32 %v456, %v459
    %463 = vrot.lane.b32.xlu0 %v457, 32
    %v464 = vpop.permute.xlu0 %463
    %v466 = vmul.f32 %v456, %v464
    %468 = vrot.lane.b32.xlu0 %v466, 32
    %v469 = vpop.permute.xlu0 %468
    %v471 = vadd.f32 %v461, %v469
    %v472 = vtanh.pop %v471
    %474 = vrot.lane.b32.xlu0 %v472, 32
    %v475 = vpop.permute.xlu0 %474
    %v477 = vmul.f32 %v456, %v475
    %v479 = vrot.slane %v477, 2
    %480 = vrot.lane.b32.xlu0 %v479, 64
    %v481 = vpop.permute.xlu0 %480
    %v482 = vsel %vm273, %v481, 0
    %484 = vmatprep.subr.mxu0 0.0
    %485 = vmatpush1.msra.mxu0 0.0
    %486 = vmatprep.subr.mxu0 0.0
    %487 = vmatpush1.msra.mxu0 0.0
    %488 = vmatprep.subr.mxu0 0.0
    %489 = vmatpush1.msra.mxu0 0.0
    %490 = vmatprep.subr.mxu0 0.0
    %491 = vmatpush1.msra.mxu0 0.0
    %492 = vmatprep.subr.mxu0 0.0
    %493 = vmatpush1.msra.mxu0 0.0
    %494 = vmatprep.subr.mxu0 0.0
    %495 = vmatpush1.msra.mxu0 0.0
    %496 = vmatprep.subr.mxu0 0.0
    %497 = vmatpush1.msra.mxu0 0.0
    %498 = vmatprep.subr.mxu0 0.0
    %499 = vmatpush1.msra.mxu0 0.0
    %500 = vmatprep.subr.mxu0 0.0
    %501 = vmatpush1.msra.mxu0 0.0
    %502 = vmatprep.subr.mxu0 0.0
    %503 = vmatpush1.msra.mxu0 0.0
    %504 = vmatprep.subr.mxu0 0.0
    %505 = vmatpush1.msra.mxu0 0.0
    %506 = vmatprep.subr.mxu0 0.0
    %507 = vmatpush1.msra.mxu0 0.0
    %508 = vmatprep.subr.mxu0 0.0
    %509 = vmatpush1.msra.mxu0 %v272
    %510 = vmatprep.subr.mxu0 0.0
    %511 = vmatpush1.msra.mxu0 %v271
    %512 = vmatprep.subr.mxu0 0.0
    %513 = vmatpush1.msra.mxu0 %v270
    %514 = vmatprep.subr.mxu0 0.0
    %515 = vmatpush1.msra.mxu0 %v269
    %516 = vmatprep.subr.mxu0 0.0
    %517 = vmatpush2.msra.mxu0 0.0
    %518 = vmatprep.subr.mxu0 0.0
    %519 = vmatpush2.msra.mxu0 0.0
    %520 = vmatprep.subr.mxu0 0.0
    %521 = vmatpush2.msra.mxu0 0.0
    %522 = vmatprep.subr.mxu0 0.0
    %523 = vmatpush2.msra.mxu0 0.0
    %524 = vmatprep.subr.mxu0 0.0
    %525 = vmatpush2.msra.mxu0 0.0
    %526 = vmatprep.subr.mxu0 0.0
    %527 = vmatpush2.msra.mxu0 0.0
    %528 = vmatprep.subr.mxu0 0.0
    %529 = vmatpush2.msra.mxu0 0.0
    %530 = vmatprep.subr.mxu0 0.0
    %531 = vmatpush2.msra.mxu0 0.0
    %532 = vmatprep.subr.mxu0 0.0
    %533 = vmatpush2.msra.mxu0 0.0
    %534 = vmatprep.subr.mxu0 0.0
    %535 = vmatpush2.msra.mxu0 0.0
    %536 = vmatprep.subr.mxu0 0.0
    %537 = vmatpush2.msra.mxu0 0.0
    %538 = vmatprep.subr.mxu0 0.0
    %539 = vmatpush2.msra.mxu0 0.0
    %540 = vmatprep.subr.mxu0 0.0
    %541 = vmatpush2.msra.mxu0 0.0
    %542 = vmatprep.subr.mxu0 0.0
    %543 = vmatpush2.msra.mxu0 0.0
    %544 = vmatprep.subr.mxu0 0.0
    %545 = vmatpush2.msra.mxu0 0.0
    %546 = vmatprep.subr.mxu0 0.0
    %547 = vmatpush2.msra.mxu0 0.0
    %548 = vmatprep.mubr.f32.mxu0 0.0
    %549 = vmatmul.mubr.f32.gmra.mxu0 %v482
    %v550 = vpop.f32.mrf.mxu0
    %v551 = vadd.f32 0.0, %v550
    %v552 = vpop.f32.mrf.mxu0
    %553 = vdwg.mxu0
    %v555 = vrot.slane %v551, 4
    %v557 = vadd.f32 %v261, %v555
    %v558 = vxor.u32 %v557, 2147483648
    %v559 = vmul.f32 %v558, 1.442695
    %v560 = vpow.pop %v559
    %v561 = vadd.f32 %v560, 1.0
    %v562 = vrcp.pop %v561
    %v563 = vmul.f32 1.0, %v562
    %v564 = vtanh.pop %v557
    %v566 = vrot.slane %v471, 6
    %v568 = vmul.f32 %v563, %v566
    %570 = vrot.lane.b32.xlu0 %v564, 32
    %v571 = vpop.permute.xlu0 %570
    %v573 = vmul.f32 %v563, %v571
    %575 = vrot.lane.b32.xlu0 %v573, 32
    %v576 = vpop.permute.xlu0 %575
    %v578 = vadd.f32 %v568, %v576
    %v579 = vtanh.pop %v578
    %581 = vrot.lane.b32.xlu0 %v579, 32
    %v582 = vpop.permute.xlu0 %581
    %v584 = vmul.f32 %v563, %v582
    %v586 = vrot.slane %v584, 4
    %587 = vrot.lane.b32.xlu0 %v586, 64
    %v588 = vpop.permute.xlu0 %587
    %v589 = vsel %vm273, %v588, 0
    %591 = vmatprep.subr.mxu0 0.0
    %592 = vmatpush1.msra.mxu0 0.0
    %593 = vmatprep.subr.mxu0 0.0
    %594 = vmatpush1.msra.mxu0 0.0
    %595 = vmatprep.subr.mxu0 0.0
    %596 = vmatpush1.msra.mxu0 0.0
    %597 = vmatprep.subr.mxu0 0.0
    %598 = vmatpush1.msra.mxu0 0.0
    %599 = vmatprep.subr.mxu0 0.0
    %600 = vmatpush1.msra.mxu0 0.0
    %601 = vmatprep.subr.mxu0 0.0
    %602 = vmatpush1.msra.mxu0 0.0
    %603 = vmatprep.subr.mxu0 0.0
    %604 = vmatpush1.msra.mxu0 0.0
    %605 = vmatprep.subr.mxu0 0.0
    %606 = vmatpush1.msra.mxu0 0.0
    %607 = vmatprep.subr.mxu0 0.0
    %608 = vmatpush1.msra.mxu0 0.0
    %609 = vmatprep.subr.mxu0 0.0
    %610 = vmatpush1.msra.mxu0 0.0
    %611 = vmatprep.subr.mxu0 0.0
    %612 = vmatpush1.msra.mxu0 0.0
    %613 = vmatprep.subr.mxu0 0.0
    %614 = vmatpush1.msra.mxu0 0.0
    %615 = vmatprep.subr.mxu0 0.0
    %616 = vmatpush1.msra.mxu0 %v272
    %617 = vmatprep.subr.mxu0 0.0
    %618 = vmatpush1.msra.mxu0 %v271
    %619 = vmatprep.subr.mxu0 0.0
    %620 = vmatpush1.msra.mxu0 %v270
    %621 = vmatprep.subr.mxu0 0.0
    %622 = vmatpush1.msra.mxu0 %v269
    %623 = vmatprep.subr.mxu0 0.0
    %624 = vmatpush2.msra.mxu0 0.0
    %625 = vmatprep.subr.mxu0 0.0
    %626 = vmatpush2.msra.mxu0 0.0
    %627 = vmatprep.subr.mxu0 0.0
    %628 = vmatpush2.msra.mxu0 0.0
    %629 = vmatprep.subr.mxu0 0.0
    %630 = vmatpush2.msra.mxu0 0.0
    %631 = vmatprep.subr.mxu0 0.0
    %632 = vmatpush2.msra.mxu0 0.0
    %633 = vmatprep.subr.mxu0 0.0
    %634 = vmatpush2.msra.mxu0 0.0
    %635 = vmatprep.subr.mxu0 0.0
    %636 = vmatpush2.msra.mxu0 0.0
    %637 = vmatprep.subr.mxu0 0.0
    %638 = vmatpush2.msra.mxu0 0.0
    %639 = vmatprep.subr.mxu0 0.0
    %640 = vmatpush2.msra.mxu0 0.0
    %641 = vmatprep.subr.mxu0 0.0
    %642 = vmatpush2.msra.mxu0 0.0
    %643 = vmatprep.subr.mxu0 0.0
    %644 = vmatpush2.msra.mxu0 0.0
    %645 = vmatprep.subr.mxu0 0.0
    %646 = vmatpush2.msra.mxu0 0.0
    %647 = vmatprep.subr.mxu0 0.0
    %648 = vmatpush2.msra.mxu0 0.0
    %649 = vmatprep.subr.mxu0 0.0
    %650 = vmatpush2.msra.mxu0 0.0
    %651 = vmatprep.subr.mxu0 0.0
    %652 = vmatpush2.msra.mxu0 0.0
    %653 = vmatprep.subr.mxu0 0.0
    %654 = vmatpush2.msra.mxu0 0.0
    %655 = vmatprep.mubr.f32.mxu0 0.0
    %656 = vmatmul.mubr.f32.gmra.mxu0 %v589
    %v657 = vpop.f32.mrf.mxu0
    %v658 = vadd.f32 0.0, %v657
    %v659 = vpop.f32.mrf.mxu0
    %660 = vdwg.mxu0
    %v662 = vrot.slane %v658, 2
    %v664 = vadd.f32 %v261, %v662
    %v665 = vxor.u32 %v664, 2147483648
    %v666 = vmul.f32 %v665, 1.442695
    %v667 = vpow.pop %v666
    %v668 = vadd.f32 %v667, 1.0
    %v669 = vrcp.pop %v668
    %v670 = vmul.f32 1.0, %v669
    %v671 = vtanh.pop %v664
    %v673 = vrot.slane %v578, 6
    %v675 = vmul.f32 %v670, %v673
    %677 = vrot.lane.b32.xlu0 %v671, 32
    %v678 = vpop.permute.xlu0 %677
    %v680 = vmul.f32 %v670, %v678
    %682 = vrot.lane.b32.xlu0 %v680, 32
    %v683 = vpop.permute.xlu0 %682
    %v685 = vadd.f32 %v675, %v683
    %v686 = vtanh.pop %v685
    %688 = vrot.lane.b32.xlu0 %v686, 32
    %v689 = vpop.permute.xlu0 %688
    %v691 = vmul.f32 %v670, %v689
    %v693 = vrot.slane %v691, 6
    %694 = vrot.lane.b32.xlu0 %v693, 64
    %v695 = vpop.permute.xlu0 %694
    %v696 = vsel %vm273, %v695, 0
    %698 = vmatprep.subr.mxu0 0.0
    %699 = vmatpush1.msra.mxu0 0.0
    %700 = vmatprep.subr.mxu0 0.0
    %701 = vmatpush1.msra.mxu0 0.0
    %702 = vmatprep.subr.mxu0 0.0
    %703 = vmatpush1.msra.mxu0 0.0
    %704 = vmatprep.subr.mxu0 0.0
    %705 = vmatpush1.msra.mxu0 0.0
    %706 = vmatprep.subr.mxu0 0.0
    %707 = vmatpush1.msra.mxu0 0.0
    %708 = vmatprep.subr.mxu0 0.0
    %709 = vmatpush1.msra.mxu0 0.0
    %710 = vmatprep.subr.mxu0 0.0
    %711 = vmatpush1.msra.mxu0 0.0
    %712 = vmatprep.subr.mxu0 0.0
    %713 = vmatpush1.msra.mxu0 0.0
    %714 = vmatprep.subr.mxu0 0.0
    %715 = vmatpush1.msra.mxu0 0.0
    %716 = vmatprep.subr.mxu0 0.0
    %717 = vmatpush1.msra.mxu0 0.0
    %718 = vmatprep.subr.mxu0 0.0
    %719 = vmatpush1.msra.mxu0 0.0
    %720 = vmatprep.subr.mxu0 0.0
    %721 = vmatpush1.msra.mxu0 0.0
    %722 = vmatprep.subr.mxu0 0.0
    %723 = vmatpush1.msra.mxu0 %v272
    %724 = vmatprep.subr.mxu0 0.0
    %725 = vmatpush1.msra.mxu0 %v271
    %726 = vmatprep.subr.mxu0 0.0
    %727 = vmatpush1.msra.mxu0 %v270
    %728 = vmatprep.subr.mxu0 0.0
    %729 = vmatpush1.msra.mxu0 %v269
    %730 = vmatprep.subr.mxu0 0.0
    %731 = vmatpush2.msra.mxu0 0.0
    %732 = vmatprep.subr.mxu0 0.0
    %733 = vmatpush2.msra.mxu0 0.0
    %734 = vmatprep.subr.mxu0 0.0
    %735 = vmatpush2.msra.mxu0 0.0
    %736 = vmatprep.subr.mxu0 0.0
    %737 = vmatpush2.msra.mxu0 0.0
    %738 = vmatprep.subr.mxu0 0.0
    %739 = vmatpush2.msra.mxu0 0.0
    %740 = vmatprep.subr.mxu0 0.0
    %741 = vmatpush2.msra.mxu0 0.0
    %742 = vmatprep.subr.mxu0 0.0
    %743 = vmatpush2.msra.mxu0 0.0
    %744 = vmatprep.subr.mxu0 0.0
    %745 = vmatpush2.msra.mxu0 0.0
    %746 = vmatprep.subr.mxu0 0.0
    %747 = vmatpush2.msra.mxu0 0.0
    %748 = vmatprep.subr.mxu0 0.0
    %749 = vmatpush2.msra.mxu0 0.0
    %750 = vmatprep.subr.mxu0 0.0
    %751 = vmatpush2.msra.mxu0 0.0
    %752 = vmatprep.subr.mxu0 0.0
    %753 = vmatpush2.msra.mxu0 0.0
    %754 = vmatprep.subr.mxu0 0.0
    %755 = vmatpush2.msra.mxu0 0.0
    %756 = vmatprep.subr.mxu0 0.0
    %757 = vmatpush2.msra.mxu0 0.0
    %758 = vmatprep.subr.mxu0 0.0
    %759 = vmatpush2.msra.mxu0 0.0
    %760 = vmatprep.subr.mxu0 0.0
    %761 = vmatpush2.msra.mxu0 0.0
    %762 = vmatprep.mubr.f32.mxu0 0.0
    %763 = vmatmul.mubr.f32.gmra.mxu0 %v696
    %v764 = vpop.f32.mrf.mxu0
    %v765 = vadd.f32 0.0, %v764
    %v766 = vpop.f32.mrf.mxu0
    %767 = vdwg.mxu0
    %v768 = vadd.f32 %v266, %v765
    %v769 = vxor.u32 %v768, 2147483648
    %v770 = vmul.f32 %v769, 1.442695
    %v771 = vpow.pop %v770
    %v772 = vadd.f32 %v771, 1.0
    %v773 = vrcp.pop %v772
    %v774 = vmul.f32 1.0, %v773
    %v775 = vtanh.pop %v768
    %v777 = vrot.slane %v685, 6
    %v779 = vmul.f32 %v774, %v777
    %781 = vrot.lane.b32.xlu0 %v775, 32
    %v782 = vpop.permute.xlu0 %781
    %v784 = vmul.f32 %v774, %v782
    %786 = vrot.lane.b32.xlu0 %v784, 32
    %v787 = vpop.permute.xlu0 %786
    %v789 = vadd.f32 %v779, %v787
    %v790 = vtanh.pop %v789
    %792 = vrot.lane.b32.xlu0 %v790, 32
    %v793 = vpop.permute.xlu0 %792
    %v795 = vmul.f32 %v774, %v793
    %797 = vrot.lane.b32.xlu0 %v795, 64
    %v798 = vpop.permute.xlu0 %797
    %v799 = vsel %vm273, %v798, 0
    %801 = vmatprep.subr.mxu0 0.0
    %802 = vmatpush1.msra.mxu0 0.0
    %803 = vmatprep.subr.mxu0 0.0
    %804 = vmatpush1.msra.mxu0 0.0
    %805 = vmatprep.subr.mxu0 0.0
    %806 = vmatpush1.msra.mxu0 0.0
    %807 = vmatprep.subr.mxu0 0.0
    %808 = vmatpush1.msra.mxu0 0.0
    %809 = vmatprep.subr.mxu0 0.0
    %810 = vmatpush1.msra.mxu0 0.0
    %811 = vmatprep.subr.mxu0 0.0
    %812 = vmatpush1.msra.mxu0 0.0
    %813 = vmatprep.subr.mxu0 0.0
    %814 = vmatpush1.msra.mxu0 0.0
    %815 = vmatprep.subr.mxu0 0.0
    %816 = vmatpush1.msra.mxu0 0.0
    %817 = vmatprep.subr.mxu0 0.0
    %818 = vmatpush1.msra.mxu0 0.0
    %819 = vmatprep.subr.mxu0 0.0
    %820 = vmatpush1.msra.mxu0 0.0
    %821 = vmatprep.subr.mxu0 0.0
    %822 = vmatpush1.msra.mxu0 0.0
    %823 = vmatprep.subr.mxu0 0.0
    %824 = vmatpush1.msra.mxu0 0.0
    %825 = vmatprep.subr.mxu0 0.0
    %826 = vmatpush1.msra.mxu0 %v272
    %827 = vmatprep.subr.mxu0 0.0
    %828 = vmatpush1.msra.mxu0 %v271
    %829 = vmatprep.subr.mxu0 0.0
    %830 = vmatpush1.msra.mxu0 %v270
    %831 = vmatprep.subr.mxu0 0.0
    %832 = vmatpush1.msra.mxu0 %v269
    %833 = vmatprep.subr.mxu0 0.0
    %834 = vmatpush2.msra.mxu0 0.0
    %835 = vmatprep.subr.mxu0 0.0
    %836 = vmatpush2.msra.mxu0 0.0
    %837 = vmatprep.subr.mxu0 0.0
    %838 = vmatpush2.msra.mxu0 0.0
    %839 = vmatprep.subr.mxu0 0.0
    %840 = vmatpush2.msra.mxu0 0.0
    %841 = vmatprep.subr.mxu0 0.0
    %842 = vmatpush2.msra.mxu0 0.0
    %843 = vmatprep.subr.mxu0 0.0
    %844 = vmatpush2.msra.mxu0 0.0
    %845 = vmatprep.subr.mxu0 0.0
    %846 = vmatpush2.msra.mxu0 0.0
    %847 = vmatprep.subr.mxu0 0.0
    %848 = vmatpush2.msra.mxu0 0.0
    %849 = vmatprep.subr.mxu0 0.0
    %850 = vmatpush2.msra.mxu0 0.0
    %851 = vmatprep.subr.mxu0 0.0
    %852 = vmatpush2.msra.mxu0 0.0
    %853 = vmatprep.subr.mxu0 0.0
    %854 = vmatpush2.msra.mxu0 0.0
    %855 = vmatprep.subr.mxu0 0.0
    %856 = vmatpush2.msra.mxu0 0.0
    %857 = vmatprep.subr.mxu0 0.0
    %858 = vmatpush2.msra.mxu0 0.0
    %859 = vmatprep.subr.mxu0 0.0
    %860 = vmatpush2.msra.mxu0 0.0
    %861 = vmatprep.subr.mxu0 0.0
    %862 = vmatpush2.msra.mxu0 0.0
    %863 = vmatprep.subr.mxu0 0.0
    %864 = vmatpush2.msra.mxu0 0.0
    %865 = vmatprep.mubr.f32.mxu0 0.0
    %866 = vmatmul.mubr.f32.gmra.mxu0 %v799
    %v867 = vpop.f32.mrf.mxu0
    %v868 = vadd.f32 0.0, %v867
    %v869 = vpop.f32.mrf.mxu0
    %870 = vdwg.mxu0
    %v872 = vrot.slane %v868, 6
    %v874 = vadd.f32 %v266, %v872
    %v875 = vxor.u32 %v874, 2147483648
    %v876 = vmul.f32 %v875, 1.442695
    %v877 = vpow.pop %v876
    %v878 = vadd.f32 %v877, 1.0
    %v879 = vrcp.pop %v878
    %v880 = vmul.f32 1.0, %v879
    %v881 = vtanh.pop %v874
    %v883 = vrot.slane %v789, 6
    %v885 = vmul.f32 %v880, %v883
    %887 = vrot.lane.b32.xlu0 %v881, 32
    %v888 = vpop.permute.xlu0 %887
    %v890 = vmul.f32 %v880, %v888
    %892 = vrot.lane.b32.xlu0 %v890, 32
    %v893 = vpop.permute.xlu0 %892
    %v895 = vadd.f32 %v885, %v893
    %v896 = vtanh.pop %v895
    %898 = vrot.lane.b32.xlu0 %v896, 32
    %v899 = vpop.permute.xlu0 %898
    %v901 = vmul.f32 %v880, %v899
    %v903 = vrot.slane %v901, 2
    %904 = vrot.lane.b32.xlu0 %v903, 64
    %v905 = vpop.permute.xlu0 %904
    %v906 = vsel %vm273, %v905, 0
    %908 = vmatprep.subr.mxu0 0.0
    %909 = vmatpush1.msra.mxu0 0.0
    %910 = vmatprep.subr.mxu0 0.0
    %911 = vmatpush1.msra.mxu0 0.0
    %912 = vmatprep.subr.mxu0 0.0
    %913 = vmatpush1.msra.mxu0 0.0
    %914 = vmatprep.subr.mxu0 0.0
    %915 = vmatpush1.msra.mxu0 0.0
    %916 = vmatprep.subr.mxu0 0.0
    %917 = vmatpush1.msra.mxu0 0.0
    %918 = vmatprep.subr.mxu0 0.0
    %919 = vmatpush1.msra.mxu0 0.0
    %920 = vmatprep.subr.mxu0 0.0
    %921 = vmatpush1.msra.mxu0 0.0
    %922 = vmatprep.subr.mxu0 0.0
    %923 = vmatpush1.msra.mxu0 0.0
    %924 = vmatprep.subr.mxu0 0.0
    %925 = vmatpush1.msra.mxu0 0.0
    %926 = vmatprep.subr.mxu0 0.0
    %927 = vmatpush1.msra.mxu0 0.0
    %928 = vmatprep.subr.mxu0 0.0
    %929 = vmatpush1.msra.mxu0 0.0
    %930 = vmatprep.subr.mxu0 0.0
    %931 = vmatpush1.msra.mxu0 0.0
    %932 = vmatprep.subr.mxu0 0.0
    %933 = vmatpush1.msra.mxu0 %v272
    %934 = vmatprep.subr.mxu0 0.0
    %935 = vmatpush1.msra.mxu0 %v271
    %936 = vmatprep.subr.mxu0 0.0
    %937 = vmatpush1.msra.mxu0 %v270
    %938 = vmatprep.subr.mxu0 0.0
    %939 = vmatpush1.msra.mxu0 %v269
    %940 = vmatprep.subr.mxu0 0.0
    %941 = vmatpush2.msra.mxu0 0.0
    %942 = vmatprep.subr.mxu0 0.0
    %943 = vmatpush2.msra.mxu0 0.0
    %944 = vmatprep.subr.mxu0 0.0
    %945 = vmatpush2.msra.mxu0 0.0
    %946 = vmatprep.subr.mxu0 0.0
    %947 = vmatpush2.msra.mxu0 0.0
    %948 = vmatprep.subr.mxu0 0.0
    %949 = vmatpush2.msra.mxu0 0.0
    %950 = vmatprep.subr.mxu0 0.0
    %951 = vmatpush2.msra.mxu0 0.0
    %952 = vmatprep.subr.mxu0 0.0
    %953 = vmatpush2.msra.mxu0 0.0
    %954 = vmatprep.subr.mxu0 0.0
    %955 = vmatpush2.msra.mxu0 0.0
    %956 = vmatprep.subr.mxu0 0.0
    %957 = vmatpush2.msra.mxu0 0.0
    %958 = vmatprep.subr.mxu0 0.0
    %959 = vmatpush2.msra.mxu0 0.0
    %960 = vmatprep.subr.mxu0 0.0
    %961 = vmatpush2.msra.mxu0 0.0
    %962 = vmatprep.subr.mxu0 0.0
    %963 = vmatpush2.msra.mxu0 0.0
    %964 = vmatprep.subr.mxu0 0.0
    %965 = vmatpush2.msra.mxu0 0.0
    %966 = vmatprep.subr.mxu0 0.0
    %967 = vmatpush2.msra.mxu0 0.0
    %968 = vmatprep.subr.mxu0 0.0
    %969 = vmatpush2.msra.mxu0 0.0
    %970 = vmatprep.subr.mxu0 0.0
    %971 = vmatpush2.msra.mxu0 0.0
    %972 = vmatprep.mubr.f32.mxu0 0.0
    %973 = vmatmul.mubr.f32.gmra.mxu0 %v906
    %v974 = vpop.f32.mrf.mxu0
    %v975 = vadd.f32 0.0, %v974
    %v976 = vpop.f32.mrf.mxu0
    %977 = vdwg.mxu0
    %v979 = vrot.slane %v975, 4
    %v981 = vadd.f32 %v266, %v979
    %v982 = vxor.u32 %v981, 2147483648
    %v983 = vmul.f32 %v982, 1.442695
    %v984 = vpow.pop %v983
    %v985 = vadd.f32 %v984, 1.0
    %v986 = vrcp.pop %v985
    %v987 = vmul.f32 1.0, %v986
    %v988 = vtanh.pop %v981
    %v990 = vrot.slane %v895, 6
    %v992 = vmul.f32 %v987, %v990
    %994 = vrot.lane.b32.xlu0 %v988, 32
    %v995 = vpop.permute.xlu0 %994
    %v997 = vmul.f32 %v987, %v995
    %999 = vrot.lane.b32.xlu0 %v997, 32
    %v1000 = vpop.permute.xlu0 %999
    %v1002 = vadd.f32 %v992, %v1000
    %v1003 = vtanh.pop %v1002
    %1005 = vrot.lane.b32.xlu0 %v1003, 32
    %v1006 = vpop.permute.xlu0 %1005
    %v1008 = vmul.f32 %v987, %v1006
    %v1010 = vrot.slane %v1008, 4
    %1011 = vrot.lane.b32.xlu0 %v1010, 64
    %v1012 = vpop.permute.xlu0 %1011
    %v1013 = vsel %vm273, %v1012, 0
    %1015 = vmatprep.subr.mxu0 0.0
    %1016 = vmatpush1.msra.mxu0 0.0
    %1017 = vmatprep.subr.mxu0 0.0
    %1018 = vmatpush1.msra.mxu0 0.0
    %1019 = vmatprep.subr.mxu0 0.0
    %1020 = vmatpush1.msra.mxu0 0.0
    %1021 = vmatprep.subr.mxu0 0.0
    %1022 = vmatpush1.msra.mxu0 0.0
    %1023 = vmatprep.subr.mxu0 0.0
    %1024 = vmatpush1.msra.mxu0 0.0
    %1025 = vmatprep.subr.mxu0 0.0
    %1026 = vmatpush1.msra.mxu0 0.0
    %1027 = vmatprep.subr.mxu0 0.0
    %1028 = vmatpush1.msra.mxu0 0.0
    %1029 = vmatprep.subr.mxu0 0.0
    %1030 = vmatpush1.msra.mxu0 0.0
    %1031 = vmatprep.subr.mxu0 0.0
    %1032 = vmatpush1.msra.mxu0 0.0
    %1033 = vmatprep.subr.mxu0 0.0
    %1034 = vmatpush1.msra.mxu0 0.0
    %1035 = vmatprep.subr.mxu0 0.0
    %1036 = vmatpush1.msra.mxu0 0.0
    %1037 = vmatprep.subr.mxu0 0.0
    %1038 = vmatpush1.msra.mxu0 0.0
    %1039 = vmatprep.subr.mxu0 0.0
    %1040 = vmatpush1.msra.mxu0 %v272
    %1041 = vmatprep.subr.mxu0 0.0
    %1042 = vmatpush1.msra.mxu0 %v271
    %1043 = vmatprep.subr.mxu0 0.0
    %1044 = vmatpush1.msra.mxu0 %v270
    %1045 = vmatprep.subr.mxu0 0.0
    %1046 = vmatpush1.msra.mxu0 %v269
    %1047 = vmatprep.subr.mxu0 0.0
    %1048 = vmatpush2.msra.mxu0 0.0
    %1049 = vmatprep.subr.mxu0 0.0
    %1050 = vmatpush2.msra.mxu0 0.0
    %1051 = vmatprep.subr.mxu0 0.0
    %1052 = vmatpush2.msra.mxu0 0.0
    %1053 = vmatprep.subr.mxu0 0.0
    %1054 = vmatpush2.msra.mxu0 0.0
    %1055 = vmatprep.subr.mxu0 0.0
    %1056 = vmatpush2.msra.mxu0 0.0
    %1057 = vmatprep.subr.mxu0 0.0
    %1058 = vmatpush2.msra.mxu0 0.0
    %1059 = vmatprep.subr.mxu0 0.0
    %1060 = vmatpush2.msra.mxu0 0.0
    %1061 = vmatprep.subr.mxu0 0.0
    %1062 = vmatpush2.msra.mxu0 0.0
    %1063 = vmatprep.subr.mxu0 0.0
    %1064 = vmatpush2.msra.mxu0 0.0
    %1065 = vmatprep.subr.mxu0 0.0
    %1066 = vmatpush2.msra.mxu0 0.0
    %1067 = vmatprep.subr.mxu0 0.0
    %1068 = vmatpush2.msra.mxu0 0.0
    %1069 = vmatprep.subr.mxu0 0.0
    %1070 = vmatpush2.msra.mxu0 0.0
    %1071 = vmatprep.subr.mxu0 0.0
    %1072 = vmatpush2.msra.mxu0 0.0
    %1073 = vmatprep.subr.mxu0 0.0
    %1074 = vmatpush2.msra.mxu0 0.0
    %1075 = vmatprep.subr.mxu0 0.0
    %1076 = vmatpush2.msra.mxu0 0.0
    %1077 = vmatprep.subr.mxu0 0.0
    %1078 = vmatpush2.msra.mxu0 0.0
    %1079 = vmatprep.mubr.f32.mxu0 0.0
    %1080 = vmatmul.mubr.f32.gmra.mxu0 %v1013
    %v1081 = vpop.f32.mrf.mxu0
    %v1082 = vadd.f32 0.0, %v1081
    %v1083 = vpop.f32.mrf.mxu0
    %1084 = vdwg.mxu0
    %v1086 = vrot.slane %v1082, 2
    %v1088 = vadd.f32 %v266, %v1086
    %v1089 = vxor.u32 %v1088, 2147483648
    %v1090 = vmul.f32 %v1089, 1.442695
    %v1091 = vpow.pop %v1090
    %v1092 = vadd.f32 %v1091, 1.0
    %v1093 = vrcp.pop %v1092
    %v1094 = vmul.f32 1.0, %v1093
    %v1095 = vtanh.pop %v1088
    %v1097 = vrot.slane %v1002, 6
    %v1099 = vmul.f32 %v1094, %v1097
    %1101 = vrot.lane.b32.xlu0 %v1095, 32
    %v1102 = vpop.permute.xlu0 %1101
    %v1104 = vmul.f32 %v1094, %v1102
    %1106 = vrot.lane.b32.xlu0 %v1104, 32
    %v1107 = vpop.permute.xlu0 %1106
    %v1109 = vadd.f32 %v1099, %v1107
    %v1110 = vtanh.pop %v1109
    %1112 = vrot.lane.b32.xlu0 %v1110, 32
    %v1113 = vpop.permute.xlu0 %1112
    %v1115 = vmul.f32 %v1094, %v1113
    %v1116 = vld [vmem:[%s6] sm:$0xff]
    %v1117 = vld [vmem:[%s6 + $0x8] sm:$0xff]
    %v1118 = vld [vmem:[%s6 + $0x10] sm:$0xff]
    %v1119 = vld [vmem:[%s6 + $0x18] sm:$0xff]
    %v1121 = vrot.slane %v1115, 6
    %1122 = vrot.lane.b32.xlu0 %v1121, 64
    %v1123 = vpop.permute.xlu0 %1122
    %v1124 = vsel %vm273, %v1123, 0
    %1126 = vmatprep.subr.mxu0 0.0
    %1127 = vmatpush1.msra.mxu0 0.0
    %1128 = vmatprep.subr.mxu0 0.0
    %1129 = vmatpush1.msra.mxu0 0.0
    %1130 = vmatprep.subr.mxu0 0.0
    %1131 = vmatpush1.msra.mxu0 0.0
    %1132 = vmatprep.subr.mxu0 0.0
    %1133 = vmatpush1.msra.mxu0 0.0
    %1134 = vmatprep.subr.mxu0 0.0
    %1135 = vmatpush1.msra.mxu0 0.0
    %1136 = vmatprep.subr.mxu0 0.0
    %1137 = vmatpush1.msra.mxu0 0.0
    %1138 = vmatprep.subr.mxu0 0.0
    %1139 = vmatpush1.msra.mxu0 0.0
    %1140 = vmatprep.subr.mxu0 0.0
    %1141 = vmatpush1.msra.mxu0 0.0
    %1142 = vmatprep.subr.mxu0 0.0
    %1143 = vmatpush1.msra.mxu0 0.0
    %1144 = vmatprep.subr.mxu0 0.0
    %1145 = vmatpush1.msra.mxu0 0.0
    %1146 = vmatprep.subr.mxu0 0.0
    %1147 = vmatpush1.msra.mxu0 0.0
    %1148 = vmatprep.subr.mxu0 0.0
    %1149 = vmatpush1.msra.mxu0 0.0
    %1150 = vmatprep.subr.mxu0 0.0
    %1151 = vmatpush1.msra.mxu0 %v1119
    %1152 = vmatprep.subr.mxu0 0.0
    %1153 = vmatpush1.msra.mxu0 %v1118
    %1154 = vmatprep.subr.mxu0 0.0
    %1155 = vmatpush1.msra.mxu0 %v1117
    %1156 = vmatprep.subr.mxu0 0.0
    %1157 = vmatpush1.msra.mxu0 %v1116
    %1158 = vmatprep.subr.mxu0 0.0
    %1159 = vmatpush2.msra.mxu0 0.0
    %1160 = vmatprep.subr.mxu0 0.0
    %1161 = vmatpush2.msra.mxu0 0.0
    %1162 = vmatprep.subr.mxu0 0.0
    %1163 = vmatpush2.msra.mxu0 0.0
    %1164 = vmatprep.subr.mxu0 0.0
    %1165 = vmatpush2.msra.mxu0 0.0
    %1166 = vmatprep.subr.mxu0 0.0
    %1167 = vmatpush2.msra.mxu0 0.0
    %1168 = vmatprep.subr.mxu0 0.0
    %1169 = vmatpush2.msra.mxu0 0.0
    %1170 = vmatprep.subr.mxu0 0.0
    %1171 = vmatpush2.msra.mxu0 0.0
    %1172 = vmatprep.subr.mxu0 0.0
    %1173 = vmatpush2.msra.mxu0 0.0
    %1174 = vmatprep.subr.mxu0 0.0
    %1175 = vmatpush2.msra.mxu0 0.0
    %1176 = vmatprep.subr.mxu0 0.0
    %1177 = vmatpush2.msra.mxu0 0.0
    %1178 = vmatprep.subr.mxu0 0.0
    %1179 = vmatpush2.msra.mxu0 0.0
    %1180 = vmatprep.subr.mxu0 0.0
    %1181 = vmatpush2.msra.mxu0 0.0
    %1182 = vmatprep.subr.mxu0 0.0
    %1183 = vmatpush2.msra.mxu0 0.0
    %1184 = vmatprep.subr.mxu0 0.0
    %1185 = vmatpush2.msra.mxu0 0.0
    %1186 = vmatprep.subr.mxu0 0.0
    %1187 = vmatpush2.msra.mxu0 0.0
    %1188 = vmatprep.subr.mxu0 0.0
    %1189 = vmatpush2.msra.mxu0 0.0
    %1190 = vmatprep.mubr.f32.mxu0 0.0
    %1191 = vmatmul.mubr.f32.gmra.mxu0 %v1124
    %v1192 = vpop.f32.mrf.mxu0
    %v1193 = vadd.f32 0.0, %v1192
    %v1194 = vpop.f32.mrf.mxu0
    %1195 = vdwg.mxu0
    %v1196 = vadd.f32 %v174, %v1193
    %v1197 = vmax.f32 %v1196, 0.0
    %v1198 = vld [vmem:[#allocation8] sm:$0xff]
    %v1199 = vld [vmem:[#allocation8 + $0x8] sm:$0xff]
    %v1200 = vld [vmem:[#allocation8 + $0x10] sm:$0xff]
    %v1201 = vld [vmem:[#allocation8 + $0x18] sm:$0xff]
    %v1202 = vld [vmem:[%s9] sm:$0x1]
    %v1204 = vlaneseq
    %v1205 = vshrl.u32 %v1204, 7
    %v1206 = vsub.s32 0, %v1205
    %v1207 = vrot.slane %v1202, %v1206
    %v1210 = vsel %vm273, %v1197, 0
    %1212 = vmatprep.subr.mxu0 0.0
    %1213 = vmatpush1.msra.mxu0 0.0
    %1214 = vmatprep.subr.mxu0 0.0
    %1215 = vmatpush1.msra.mxu0 0.0
    %1216 = vmatprep.subr.mxu0 0.0
    %1217 = vmatpush1.msra.mxu0 0.0
    %1218 = vmatprep.subr.mxu0 0.0
    %1219 = vmatpush1.msra.mxu0 0.0
    %1220 = vmatprep.subr.mxu0 0.0
    %1221 = vmatpush1.msra.mxu0 0.0
    %1222 = vmatprep.subr.mxu0 0.0
    %1223 = vmatpush1.msra.mxu0 0.0
    %1224 = vmatprep.subr.mxu0 0.0
    %1225 = vmatpush1.msra.mxu0 0.0
    %1226 = vmatprep.subr.mxu0 0.0
    %1227 = vmatpush1.msra.mxu0 0.0
    %1228 = vmatprep.subr.mxu0 0.0
    %1229 = vmatpush1.msra.mxu0 0.0
    %1230 = vmatprep.subr.mxu0 0.0
    %1231 = vmatpush1.msra.mxu0 0.0
    %1232 = vmatprep.subr.mxu0 0.0
    %1233 = vmatpush1.msra.mxu0 0.0
    %1234 = vmatprep.subr.mxu0 0.0
    %1235 = vmatpush1.msra.mxu0 0.0
    %1236 = vmatprep.subr.mxu0 0.0
    %1237 = vmatpush1.msra.mxu0 %v1201
    %1238 = vmatprep.subr.mxu0 0.0
    %1239 = vmatpush1.msra.mxu0 %v1200
    %1240 = vmatprep.subr.mxu0 0.0
    %1241 = vmatpush1.msra.mxu0 %v1199
    %1242 = vmatprep.subr.mxu0 0.0
    %1243 = vmatpush1.msra.mxu0 %v1198
    %1244 = vmatprep.subr.mxu0 0.0
    %1245 = vmatpush2.msra.mxu0 0.0
    %1246 = vmatprep.subr.mxu0 0.0
    %1247 = vmatpush2.msra.mxu0 0.0
    %1248 = vmatprep.subr.mxu0 0.0
    %1249 = vmatpush2.msra.mxu0 0.0
    %1250 = vmatprep.subr.mxu0 0.0
    %1251 = vmatpush2.msra.mxu0 0.0
    %1252 = vmatprep.subr.mxu0 0.0
    %1253 = vmatpush2.msra.mxu0 0.0
    %1254 = vmatprep.subr.mxu0 0.0
    %1255 = vmatpush2.msra.mxu0 0.0
    %1256 = vmatprep.subr.mxu0 0.0
    %1257 = vmatpush2.msra.mxu0 0.0
    %1258 = vmatprep.subr.mxu0 0.0
    %1259 = vmatpush2.msra.mxu0 0.0
    %1260 = vmatprep.subr.mxu0 0.0
    %1261 = vmatpush2.msra.mxu0 0.0
    %1262 = vmatprep.subr.mxu0 0.0
    %1263 = vmatpush2.msra.mxu0 0.0
    %1264 = vmatprep.subr.mxu0 0.0
    %1265 = vmatpush2.msra.mxu0 0.0
    %1266 = vmatprep.subr.mxu0 0.0
    %1267 = vmatpush2.msra.mxu0 0.0
    %1268 = vmatprep.subr.mxu0 0.0
    %1269 = vmatpush2.msra.mxu0 0.0
    %1270 = vmatprep.subr.mxu0 0.0
    %1271 = vmatpush2.msra.mxu0 0.0
    %1272 = vmatprep.subr.mxu0 0.0
    %1273 = vmatpush2.msra.mxu0 0.0
    %1274 = vmatprep.subr.mxu0 0.0
    %1275 = vmatpush2.msra.mxu0 0.0
    %1276 = vmatprep.mubr.f32.mxu0 0.0
    %1277 = vmatmul.mubr.f32.gmra.mxu0 %v1210
    %v1278 = vpop.f32.mrf.mxu0
    %v1279 = vadd.f32 %v1207, %v1278
    %v1280 = vpop.f32.mrf.mxu0
    %1281 = vdwg.mxu0
    %v1282 = vadd.f32 %v1279, 3.0
    %v1283 = vmax.f32 %v1282, 0.0
    %v1284 = vmin.f32 %v1283, 6.0
    %v1285 = vmul.f32 %v1279, %v1284
    %v1286 = vmul.f32 %v1285, 0.16666667
    %v1287 = vld [vmem:[%s10] sm:$0xff]
    %v1288 = vld [vmem:[%s10 + $0x8] sm:$0xff]
    %v1289 = vld [vmem:[%s10 + $0x10] sm:$0xff]
    %v1290 = vld [vmem:[%s10 + $0x18] sm:$0xff]
    %v1291 = vld [vmem:[%s11] sm:$0x1]
    %v1293 = vlaneseq
    %v1294 = vshrl.u32 %v1293, 7
    %v1295 = vsub.s32 0, %v1294
    %v1296 = vrot.slane %v1291, %v1295
    %v1299 = vsel %vm273, %v1286, 0
    %1301 = vmatprep.subr.mxu0 0.0
    %1302 = vmatpush1.msra.mxu0 0.0
    %1303 = vmatprep.subr.mxu0 0.0
    %1304 = vmatpush1.msra.mxu0 0.0
    %1305 = vmatprep.subr.mxu0 0.0
    %1306 = vmatpush1.msra.mxu0 0.0
    %1307 = vmatprep.subr.mxu0 0.0
    %1308 = vmatpush1.msra.mxu0 0.0
    %1309 = vmatprep.subr.mxu0 0.0
    %1310 = vmatpush1.msra.mxu0 0.0
    %1311 = vmatprep.subr.mxu0 0.0
    %1312 = vmatpush1.msra.mxu0 0.0
    %1313 = vmatprep.subr.mxu0 0.0
    %1314 = vmatpush1.msra.mxu0 0.0
    %1315 = vmatprep.subr.mxu0 0.0
    %1316 = vmatpush1.msra.mxu0 0.0
    %1317 = vmatprep.subr.mxu0 0.0
    %1318 = vmatpush1.msra.mxu0 0.0
    %1319 = vmatprep.subr.mxu0 0.0
    %1320 = vmatpush1.msra.mxu0 0.0
    %1321 = vmatprep.subr.mxu0 0.0
    %1322 = vmatpush1.msra.mxu0 0.0
    %1323 = vmatprep.subr.mxu0 0.0
    %1324 = vmatpush1.msra.mxu0 0.0
    %1325 = vmatprep.subr.mxu0 0.0
    %1326 = vmatpush1.msra.mxu0 %v1290
    %1327 = vmatprep.subr.mxu0 0.0
    %1328 = vmatpush1.msra.mxu0 %v1289
    %1329 = vmatprep.subr.mxu0 0.0
    %1330 = vmatpush1.msra.mxu0 %v1288
    %1331 = vmatprep.subr.mxu0 0.0
    %1332 = vmatpush1.msra.mxu0 %v1287
    %1333 = vmatprep.subr.mxu0 0.0
    %1334 = vmatpush2.msra.mxu0 0.0
    %1335 = vmatprep.subr.mxu0 0.0
    %1336 = vmatpush2.msra.mxu0 0.0
    %1337 = vmatprep.subr.mxu0 0.0
    %1338 = vmatpush2.msra.mxu0 0.0
    %1339 = vmatprep.subr.mxu0 0.0
    %1340 = vmatpush2.msra.mxu0 0.0
    %1341 = vmatprep.subr.mxu0 0.0
    %1342 = vmatpush2.msra.mxu0 0.0
    %1343 = vmatprep.subr.mxu0 0.0
    %1344 = vmatpush2.msra.mxu0 0.0
    %1345 = vmatprep.subr.mxu0 0.0
    %1346 = vmatpush2.msra.mxu0 0.0
    %1347 = vmatprep.subr.mxu0 0.0
    %1348 = vmatpush2.msra.mxu0 0.0
    %1349 = vmatprep.subr.mxu0 0.0
    %1350 = vmatpush2.msra.mxu0 0.0
    %1351 = vmatprep.subr.mxu0 0.0
    %1352 = vmatpush2.msra.mxu0 0.0
    %1353 = vmatprep.subr.mxu0 0.0
    %1354 = vmatpush2.msra.mxu0 0.0
    %1355 = vmatprep.subr.mxu0 0.0
    %1356 = vmatpush2.msra.mxu0 0.0
    %1357 = vmatprep.subr.mxu0 0.0
    %1358 = vmatpush2.msra.mxu0 0.0
    %1359 = vmatprep.subr.mxu0 0.0
    %1360 = vmatpush2.msra.mxu0 0.0
    %1361 = vmatprep.subr.mxu0 0.0
    %1362 = vmatpush2.msra.mxu0 0.0
    %1363 = vmatprep.subr.mxu0 0.0
    %1364 = vmatpush2.msra.mxu0 0.0
    %1365 = vmatprep.mubr.f32.mxu0 0.0
    %1366 = vmatmul.mubr.f32.gmra.mxu0 %v1299
    %v1367 = vpop.f32.mrf.mxu0
    %v1368 = vadd.f32 %v1296, %v1367
    %v1369 = vpop.f32.mrf.mxu0
    %1370 = vdwg.mxu0
    %v1371 = vlaneseq
    %v1372 = vand.u32 %v1371, 127
    %vm1373 = vcmp.lt.s32.totalorder %v1372, 4
    %v1374 = vtanh.pop %v1368
    %v1375 = vmul.f32 %v1368, 1.442695
    %v1376 = vpow.pop %v1375
    %v1377 = vsel %vm1373, %v1374, %v1376
    %vm1378 = vcmask 58368
    %1379 = vst.msk [vmem:[#allocation10] sm:$0x3] %vm1378, %v1377
    // Predicated region
    $region66: #{tpu_custom_call.1} parent=1 // pred_check
      _
    $region67: #{tpu_custom_call.1} parent=1 // pred_check_branch
      %1381 = sbr.rel (0) target = $region69
    $region68: #{tpu_custom_call.1} parent=1 // pred_region
      %s1383 = ssub.s32 32, 32
      %1384 = vsyncadd [#allocation4], %s1383
      %s1386 = sshll.u32 [#allocation10], 4
      %s1387 = int_to_ptr.vmem [resolvable:$true] %s1386
      %1389 = dma.vmem_to_hbm [thread:$0]  %s1387, 32, %s12, [#allocation4]
    $region69: #{tpu_custom_call.1} parent=1 // pred_fallthru
      _
    // Predicated region
    $region70: #{tpu_custom_call.1} parent=1 // pred_check
      _
    $region71: #{tpu_custom_call.1} parent=1 // pred_check_branch
      %1391 = sbr.rel (0) target = $region73
    $region72: #{tpu_custom_call.1} parent=1 // pred_region
      %1392 = dma.done [#allocation4], 32
    $region73: #{tpu_custom_call.1} parent=1 // pred_fallthru
      _
    %1393 = vsyncpa [#allocation3], 1
    %1394 = vsyncpa [#allocation6], 1
    %1395 = vsyncpa [#allocation9], 1
    %1396 = vsyncpa [#allocation4], 1

</llo_original>
